<compile_context>
chip_gen: v6e
topology: v6e:2x2x1
jax: 0.10.0
libtpu: 0.0.40
codegen_flags: <defaults>
</compile_context>

<pallas_src>
import functools

import jax
import jax.numpy as jnp
from jax import lax
from jax.experimental import pallas as pl
from jax.experimental.pallas import tpu as pltpu


def _attention_kernel(H, W, xe00_ref, xe01_ref, xe10_ref, xe11_ref, xd_ref,
                      we_ref, be_ref, wd_ref, bd_ref, wa_ref, ba_ref, o_ref):
    """Per-batch-element fused attention block (channel-major).

    xe??_ref : (1, Ce, (H+2)*(W+2))  parity blocks of the padded encoder input
    xd_ref   : (1, Cd, (H+3)*(W+2))  padded, flattened decoder input (raw, no ReLU)
    we_ref   : (Co, 9*Ce)            encoder 3x3 weights, col = (3*dy+dx)*Ce + ci
    wd_ref   : (Co, 9*Cd)            decoder 3x3 weights
    be_ref/bd_ref : (Co, 1)          conv biases
    wa_ref   : (Co, 1), ba_ref: (1,1)  1x1 attention conv
    o_ref    : (1, Cd, H*(W+2))      NCHW-flat output slab (junk cols trimmed outside)
    """
    f32 = jnp.float32
    Wp = W + 2                       # row stride of the flattened spatial axis
    L = H * Wp                       # lane extent of every accumulator / output slab

    # ---- decoder path: ReLU -> Conv3x3 as ONE (Co, 9*Cd) @ (9*Cd, L) matmul ----
    xd_raw = xd_ref[0]                                            # (Cd, Sp_d)
    xd_relu = jnp.maximum(xd_raw.astype(f32), 0.0)                # ReLU once (pad stays 0)
    patch_d = jnp.concatenate(
        [xd_relu[:, dy * Wp + dx: dy * Wp + dx + L]
         for dy in range(3) for dx in range(3)], axis=0)          # (9*Cd, L) im2col
    dec = jnp.dot(wd_ref[...].astype(f32), patch_d,
                  preferred_element_type=f32)                     # (Co, L)

    # ---- encoder path: ReLU -> Conv3x3 -> MaxPool2x2 (parity split: 4 dots + 3 maxes) ----
    xe_relu = [jnp.maximum(r[0].astype(f32), 0.0)
               for r in (xe00_ref, xe01_ref, xe10_ref, xe11_ref)] # 4 x (Ce, Sp_e)
    we = we_ref[...].astype(f32)                                  # (Co, 9*Ce)
    pooled = None
    for i in range(2):               # pool-window row offset
        for j in range(2):           # pool-window col offset
            pieces = []
            for dy in range(3):
                for dx in range(3):
                    pa, qy = (i + dy) % 2, (i + dy) // 2
                    pb, qx = (j + dx) % 2, (j + dx) // 2
                    off = qy * Wp + qx
                    pieces.append(xe_relu[2 * pa + pb][:, off:off + L])
            patch_e = jnp.concatenate(pieces, axis=0)             # (9*Ce, L)
            acc = jnp.dot(we, patch_e, preferred_element_type=f32)  # (Co, L)
            pooled = acc if pooled is None else jnp.maximum(pooled, acc)

    # ---- attention head: ReLU -> Conv1x1 (Co -> 1) as an 8-sublane reduction ----
    s = jnp.maximum(pooled + be_ref[...].astype(f32)              # bias commutes with max
                    + dec + bd_ref[...].astype(f32), 0.0)         # (Co, L)
    attn = jnp.sum(s * wa_ref[...].astype(f32), axis=0, keepdims=True)  # (1, L)
    attn = attn + ba_ref[...].astype(f32)

    # ---- rescale the raw decoder input in f32; single cast at the lane-dense store ----
    x2v = xd_raw[:, Wp + 1: Wp + 1 + L].astype(f32)               # (Cd, L)
    o_ref[0] = (x2v * attn).astype(o_ref.dtype)


def resunetpp_attention_block(x1, x2, w_enc, b_enc, w_dec, b_dec, w_attn, b_attn):
    """x1: (B, Ce, 2H, 2W), x2: (B, Cd, H, W); torch-layout weights/biases."""
    B, Ce, H1, W1 = x1.shape
    B2, Cd, H, W = x2.shape
    assert B == B2 and H1 == 2 * H and W1 == 2 * W
    Co = w_enc.shape[0]
    Wp = W + 2
    Sp_e = (H + 2) * Wp
    Sp_d = (H + 3) * Wp
    L = H * Wp

    # Channel-major is NCHW-native: only pad + parity-split (a partition) in the wrapper,
    # no NHWC transposes.  allow_input_fusion lets XLA fold these into the input DMAs.
    x1_pad = jnp.pad(x1, ((0, 0), (0, 0), (1, 3), (1, 3)))        # (B, Ce, 2H+4, 2W+4)
    xe_parts = [x1_pad[:, :, a::2, b::2].reshape(B, Ce, Sp_e)
                for a in range(2) for b in range(2)]              # 4 x (B, Ce, Sp_e)
    x2_pad = jnp.pad(x2, ((0, 0), (0, 0), (1, 2), (1, 1)))        # (B, Cd, H+3, W+2)
    xd = x2_pad.reshape(B, Cd, Sp_d)

    # torch (Co, Cin, 3, 3) -> (Co, 9*Cin) with column index (3*dy+dx)*Cin + ci
    we_k = jnp.transpose(w_enc, (0, 2, 3, 1)).reshape(Co, 9 * Ce)
    wd_k = jnp.transpose(w_dec, (0, 2, 3, 1)).reshape(Co, 9 * Cd)
    be_k = b_enc.reshape(Co, 1)
    bd_k = b_dec.reshape(Co, 1)
    wa_k = w_attn.reshape(Co, 1)
    ba_k = b_attn.reshape(1, 1)

    kernel = functools.partial(_attention_kernel, H, W)

    in_bytes = jnp.dtype(x2.dtype).itemsize
    w_bytes = jnp.dtype(w_enc.dtype).itemsize
    flops = B * (4 * 2 * L * (9 * Ce) * Co + 2 * L * (9 * Cd) * Co + 2 * L * Co + 2 * L * Cd)
    bytes_accessed = (B * (4 * Sp_e * Ce + Sp_d * Cd + L * Cd) * in_bytes
                      + (9 * Ce * Co + 9 * Cd * Co + 3 * Co + 1) * w_bytes)

    out_flat = pl.pallas_call(
        kernel,
        out_shape=jax.ShapeDtypeStruct((B, Cd, L), x2.dtype),
        grid=(B,),
        in_specs=[pl.BlockSpec((1, Ce, Sp_e), lambda b: (b, 0, 0))] * 4 + [
            pl.BlockSpec((1, Cd, Sp_d), lambda b: (b, 0, 0)),
            pl.BlockSpec((Co, 9 * Ce), lambda b: (0, 0)),
            pl.BlockSpec((Co, 1), lambda b: (0, 0)),
            pl.BlockSpec((Co, 9 * Cd), lambda b: (0, 0)),
            pl.BlockSpec((Co, 1), lambda b: (0, 0)),
            pl.BlockSpec((Co, 1), lambda b: (0, 0)),
            pl.BlockSpec((1, 1), lambda b: (0, 0)),
        ],
        out_specs=pl.BlockSpec((1, Cd, L), lambda b: (b, 0, 0)),
        compiler_params=pltpu.CompilerParams(
            dimension_semantics=("parallel",),
            vmem_limit_bytes=64 * 1024 * 1024,
            allow_input_fusion=[True] * 5 + [False] * 6,
        ),
        cost_estimate=pl.CostEstimate(flops=flops, transcendentals=0,
                                      bytes_accessed=bytes_accessed),
    )(*xe_parts, xd, we_k, be_k, wd_k, bd_k, wa_k, ba_k)

    # Output is already NCHW-flat; just drop the 2 junk columns per row.
    return out_flat.reshape(B, Cd, H, Wp)[:, :, :, :W]


def reference(x1, x2, w_enc, b_enc, w_dec, b_dec, w_attn, b_attn):
    """Pure-JAX reference mirroring the PyTorch forward (norm='none')."""
    dn = lax.conv_dimension_numbers(x1.shape, w_enc.shape, ('NCHW', 'OIHW', 'NCHW'))
    e = jax.nn.relu(x1)
    e = lax.conv_general_dilated(e, w_enc, (1, 1), ((1, 1), (1, 1)),
                                 dimension_numbers=dn) + b_enc.reshape(1, -1, 1, 1)
    e = lax.reduce_window(e, -jnp.inf, lax.max, (1, 1, 2, 2), (1, 1, 2, 2), 'VALID')
    d = jax.nn.relu(x2)
    d = lax.conv_general_dilated(d, w_dec, (1, 1), ((1, 1), (1, 1)),
                                 dimension_numbers=dn) + b_dec.reshape(1, -1, 1, 1)
    s = jax.nn.relu(e + d)
    a = lax.conv_general_dilated(s, w_attn, (1, 1), ((0, 0), (0, 0)),
                                 dimension_numbers=dn) + b_attn.reshape(1, -1, 1, 1)
    return a * x2


if __name__ == "__main__":
    # small config: input_encoder=8, input_decoder=8, output_dim=8, x2 16x16, x1 32x32
    B, Ce, Cd, Co, H, W = 2, 8, 8, 8, 16, 16

    key = jax.random.PRNGKey(0)
    ks = jax.random.split(key, 8)
    x1 = jax.random.normal(ks[0], (B, Ce, 2 * H, 2 * W), dtype=jnp.float32)
    x2 = jax.random.normal(ks[1], (B, Cd, H, W), dtype=jnp.float32)
    w_enc = jax.random.normal(ks[2], (Co, Ce, 3, 3), dtype=jnp.float32) * 0.1
    b_enc = jax.random.normal(ks[3], (Co,), dtype=jnp.float32) * 0.1
    w_dec = jax.random.normal(ks[4], (Co, Cd, 3, 3), dtype=jnp.float32) * 0.1
    b_dec = jax.random.normal(ks[5], (Co,), dtype=jnp.float32) * 0.1
    w_attn = jax.random.normal(ks[6], (1, Co, 1, 1), dtype=jnp.float32) * 0.1
    b_attn = jax.random.normal(ks[7], (1,), dtype=jnp.float32) * 0.1

    out = jax.block_until_ready(
        resunetpp_attention_block(x1, x2, w_enc, b_enc, w_dec, b_dec, w_attn, b_attn))
    ref = jax.block_until_ready(
        reference(x1, x2, w_enc, b_enc, w_dec, b_dec, w_attn, b_attn))

    assert out.shape == x2.shape, (out.shape, x2.shape)
    max_err = float(jnp.max(jnp.abs(out - ref)))
    assert jnp.allclose(out, ref, atol=1e-2, rtol=1e-2), max_err
    print("KERNEL_OK")
</pallas_src>

<mosaic_0001>
module attributes {stable_mosaic.version = 11 : i64} {
  func.func @_attention_kernel(%arg0: i32, %arg1: memref<1x8x324xf32, #tpu.memory_space<vmem>>, %arg2: memref<1x8x324xf32, #tpu.memory_space<vmem>>, %arg3: memref<1x8x324xf32, #tpu.memory_space<vmem>>, %arg4: memref<1x8x324xf32, #tpu.memory_space<vmem>>, %arg5: memref<1x8x342xf32, #tpu.memory_space<vmem>>, %arg6: memref<8x72xf32, #tpu.memory_space<vmem>>, %arg7: memref<8x1xf32, #tpu.memory_space<vmem>>, %arg8: memref<8x72xf32, #tpu.memory_space<vmem>>, %arg9: memref<8x1xf32, #tpu.memory_space<vmem>>, %arg10: memref<8x1xf32, #tpu.memory_space<vmem>>, %arg11: memref<1x1xf32, #tpu.memory_space<vmem>>, %arg12: memref<1x8x288xf32, #tpu.memory_space<vmem>>) attributes {dimension_semantics = [#tpu.dimension_semantics<parallel>], iteration_bounds = array<i64: 2>, scalar_prefetch = 0 : i64, scratch_operands = 0 : i64, tpu.core_type = #tpu.core_type<tc>, window_params = [{transform_indices = @transform_0, window_bounds = array<i64: 1, 8, 324>}, {transform_indices = @transform_1, window_bounds = array<i64: 1, 8, 324>}, {transform_indices = @transform_2, window_bounds = array<i64: 1, 8, 324>}, {transform_indices = @transform_3, window_bounds = array<i64: 1, 8, 324>}, {transform_indices = @transform_4, window_bounds = array<i64: 1, 8, 342>}, {pipeline_mode = #tpu.pipeline_mode<synchronous>, transform_indices = @transform_5, window_bounds = array<i64: 8, 72>}, {pipeline_mode = #tpu.pipeline_mode<synchronous>, transform_indices = @transform_6, window_bounds = array<i64: 8, 1>}, {pipeline_mode = #tpu.pipeline_mode<synchronous>, transform_indices = @transform_7, window_bounds = array<i64: 8, 72>}, {pipeline_mode = #tpu.pipeline_mode<synchronous>, transform_indices = @transform_8, window_bounds = array<i64: 8, 1>}, {pipeline_mode = #tpu.pipeline_mode<synchronous>, transform_indices = @transform_9, window_bounds = array<i64: 8, 1>}, {pipeline_mode = #tpu.pipeline_mode<synchronous>, transform_indices = @transform_10, window_bounds = array<i64: 1, 1>}, {transform_indices = @transform_11, window_bounds = array<i64: 1, 8, 288>}]} {
    %c0 = arith.constant 0 : index
    %c0_0 = arith.constant 0 : index
    %c0_1 = arith.constant 0 : index
    %0 = vector.load %arg5[%c0, %c0_0, %c0_1] : memref<1x8x342xf32, #tpu.memory_space<vmem>>, vector<1x8x342xf32>
    %1 = vector.shape_cast %0 : vector<1x8x342xf32> to vector<8x342xf32>
    %cst = arith.constant 0.000000e+00 : f32
    %2 = vector.broadcast %cst : f32 to vector<8x342xf32>
    %3 = arith.maximumf %1, %2 : vector<8x342xf32>
    %4 = vector.extract_strided_slice %3 {offsets = [0, 0], sizes = [8, 288], strides = [1, 1]} : vector<8x342xf32> to vector<8x288xf32>
    %5 = vector.extract_strided_slice %3 {offsets = [0, 1], sizes = [8, 288], strides = [1, 1]} : vector<8x342xf32> to vector<8x288xf32>
    %6 = vector.extract_strided_slice %3 {offsets = [0, 2], sizes = [8, 288], strides = [1, 1]} : vector<8x342xf32> to vector<8x288xf32>
    %7 = vector.extract_strided_slice %3 {offsets = [0, 18], sizes = [8, 288], strides = [1, 1]} : vector<8x342xf32> to vector<8x288xf32>
    %8 = vector.extract_strided_slice %3 {offsets = [0, 19], sizes = [8, 288], strides = [1, 1]} : vector<8x342xf32> to vector<8x288xf32>
    %9 = vector.extract_strided_slice %3 {offsets = [0, 20], sizes = [8, 288], strides = [1, 1]} : vector<8x342xf32> to vector<8x288xf32>
    %10 = vector.extract_strided_slice %3 {offsets = [0, 36], sizes = [8, 288], strides = [1, 1]} : vector<8x342xf32> to vector<8x288xf32>
    %11 = vector.extract_strided_slice %3 {offsets = [0, 37], sizes = [8, 288], strides = [1, 1]} : vector<8x342xf32> to vector<8x288xf32>
    %12 = vector.extract_strided_slice %3 {offsets = [0, 38], sizes = [8, 288], strides = [1, 1]} : vector<8x342xf32> to vector<8x288xf32>
    %13 = tpu.concatenate %4, %5, %6, %7, %8, %9, %10, %11, %12 in 0 : vector<8x288xf32>, vector<8x288xf32>, vector<8x288xf32>, vector<8x288xf32>, vector<8x288xf32>, vector<8x288xf32>, vector<8x288xf32>, vector<8x288xf32>, vector<8x288xf32> -> vector<72x288xf32>
    %c0_2 = arith.constant 0 : index
    %c0_3 = arith.constant 0 : index
    %14 = vector.load %arg8[%c0_2, %c0_3] : memref<8x72xf32, #tpu.memory_space<vmem>>, vector<8x72xf32>
    %cst_4 = arith.constant dense<0.000000e+00> : vector<8x288xf32>
    %15 = tpu.matmul %14, %13, %cst_4 {dimension_numbers = #tpu.dot_dimension_numbers<[1], [0], [0], [1], [0, 0, 1, 1], [], []>} : vector<8x72xf32>, vector<72x288xf32>, vector<8x288xf32> -> vector<8x288xf32>
    %c0_5 = arith.constant 0 : index
    %c0_6 = arith.constant 0 : index
    %c0_7 = arith.constant 0 : index
    %16 = vector.load %arg1[%c0_5, %c0_6, %c0_7] : memref<1x8x324xf32, #tpu.memory_space<vmem>>, vector<1x8x324xf32>
    %17 = vector.shape_cast %16 : vector<1x8x324xf32> to vector<8x324xf32>
    %cst_8 = arith.constant 0.000000e+00 : f32
    %18 = vector.broadcast %cst_8 : f32 to vector<8x324xf32>
    %19 = arith.maximumf %17, %18 : vector<8x324xf32>
    %c0_9 = arith.constant 0 : index
    %c0_10 = arith.constant 0 : index
    %c0_11 = arith.constant 0 : index
    %20 = vector.load %arg2[%c0_9, %c0_10, %c0_11] : memref<1x8x324xf32, #tpu.memory_space<vmem>>, vector<1x8x324xf32>
    %21 = vector.shape_cast %20 : vector<1x8x324xf32> to vector<8x324xf32>
    %cst_12 = arith.constant 0.000000e+00 : f32
    %22 = vector.broadcast %cst_12 : f32 to vector<8x324xf32>
    %23 = arith.maximumf %21, %22 : vector<8x324xf32>
    %c0_13 = arith.constant 0 : index
    %c0_14 = arith.constant 0 : index
    %c0_15 = arith.constant 0 : index
    %24 = vector.load %arg3[%c0_13, %c0_14, %c0_15] : memref<1x8x324xf32, #tpu.memory_space<vmem>>, vector<1x8x324xf32>
    %25 = vector.shape_cast %24 : vector<1x8x324xf32> to vector<8x324xf32>
    %cst_16 = arith.constant 0.000000e+00 : f32
    %26 = vector.broadcast %cst_16 : f32 to vector<8x324xf32>
    %27 = arith.maximumf %25, %26 : vector<8x324xf32>
    %c0_17 = arith.constant 0 : index
    %c0_18 = arith.constant 0 : index
    %c0_19 = arith.constant 0 : index
    %28 = vector.load %arg4[%c0_17, %c0_18, %c0_19] : memref<1x8x324xf32, #tpu.memory_space<vmem>>, vector<1x8x324xf32>
    %29 = vector.shape_cast %28 : vector<1x8x324xf32> to vector<8x324xf32>
    %cst_20 = arith.constant 0.000000e+00 : f32
    %30 = vector.broadcast %cst_20 : f32 to vector<8x324xf32>
    %31 = arith.maximumf %29, %30 : vector<8x324xf32>
    %c0_21 = arith.constant 0 : index
    %c0_22 = arith.constant 0 : index
    %32 = vector.load %arg6[%c0_21, %c0_22] : memref<8x72xf32, #tpu.memory_space<vmem>>, vector<8x72xf32>
    %33 = vector.extract_strided_slice %19 {offsets = [0, 0], sizes = [8, 288], strides = [1, 1]} : vector<8x324xf32> to vector<8x288xf32>
    %34 = vector.extract_strided_slice %23 {offsets = [0, 0], sizes = [8, 288], strides = [1, 1]} : vector<8x324xf32> to vector<8x288xf32>
    %35 = vector.extract_strided_slice %19 {offsets = [0, 1], sizes = [8, 288], strides = [1, 1]} : vector<8x324xf32> to vector<8x288xf32>
    %36 = vector.extract_strided_slice %27 {offsets = [0, 0], sizes = [8, 288], strides = [1, 1]} : vector<8x324xf32> to vector<8x288xf32>
    %37 = vector.extract_strided_slice %31 {offsets = [0, 0], sizes = [8, 288], strides = [1, 1]} : vector<8x324xf32> to vector<8x288xf32>
    %38 = vector.extract_strided_slice %27 {offsets = [0, 1], sizes = [8, 288], strides = [1, 1]} : vector<8x324xf32> to vector<8x288xf32>
    %39 = vector.extract_strided_slice %19 {offsets = [0, 18], sizes = [8, 288], strides = [1, 1]} : vector<8x324xf32> to vector<8x288xf32>
    %40 = vector.extract_strided_slice %23 {offsets = [0, 18], sizes = [8, 288], strides = [1, 1]} : vector<8x324xf32> to vector<8x288xf32>
    %41 = vector.extract_strided_slice %19 {offsets = [0, 19], sizes = [8, 288], strides = [1, 1]} : vector<8x324xf32> to vector<8x288xf32>
    %42 = tpu.concatenate %33, %34, %35, %36, %37, %38, %39, %40, %41 in 0 : vector<8x288xf32>, vector<8x288xf32>, vector<8x288xf32>, vector<8x288xf32>, vector<8x288xf32>, vector<8x288xf32>, vector<8x288xf32>, vector<8x288xf32>, vector<8x288xf32> -> vector<72x288xf32>
    %cst_23 = arith.constant dense<0.000000e+00> : vector<8x288xf32>
    %43 = tpu.matmul %32, %42, %cst_23 {dimension_numbers = #tpu.dot_dimension_numbers<[1], [0], [0], [1], [0, 0, 1, 1], [], []>} : vector<8x72xf32>, vector<72x288xf32>, vector<8x288xf32> -> vector<8x288xf32>
    %44 = vector.extract_strided_slice %23 {offsets = [0, 0], sizes = [8, 288], strides = [1, 1]} : vector<8x324xf32> to vector<8x288xf32>
    %45 = vector.extract_strided_slice %19 {offsets = [0, 1], sizes = [8, 288], strides = [1, 1]} : vector<8x324xf32> to vector<8x288xf32>
    %46 = vector.extract_strided_slice %23 {offsets = [0, 1], sizes = [8, 288], strides = [1, 1]} : vector<8x324xf32> to vector<8x288xf32>
    %47 = vector.extract_strided_slice %31 {offsets = [0, 0], sizes = [8, 288], strides = [1, 1]} : vector<8x324xf32> to vector<8x288xf32>
    %48 = vector.extract_strided_slice %27 {offsets = [0, 1], sizes = [8, 288], strides = [1, 1]} : vector<8x324xf32> to vector<8x288xf32>
    %49 = vector.extract_strided_slice %31 {offsets = [0, 1], sizes = [8, 288], strides = [1, 1]} : vector<8x324xf32> to vector<8x288xf32>
    %50 = vector.extract_strided_slice %23 {offsets = [0, 18], sizes = [8, 288], strides = [1, 1]} : vector<8x324xf32> to vector<8x288xf32>
    %51 = vector.extract_strided_slice %19 {offsets = [0, 19], sizes = [8, 288], strides = [1, 1]} : vector<8x324xf32> to vector<8x288xf32>
    %52 = vector.extract_strided_slice %23 {offsets = [0, 19], sizes = [8, 288], strides = [1, 1]} : vector<8x324xf32> to vector<8x288xf32>
    %53 = tpu.concatenate %44, %45, %46, %47, %48, %49, %50, %51, %52 in 0 : vector<8x288xf32>, vector<8x288xf32>, vector<8x288xf32>, vector<8x288xf32>, vector<8x288xf32>, vector<8x288xf32>, vector<8x288xf32>, vector<8x288xf32>, vector<8x288xf32> -> vector<72x288xf32>
    %cst_24 = arith.constant dense<0.000000e+00> : vector<8x288xf32>
    %54 = tpu.matmul %32, %53, %cst_24 {dimension_numbers = #tpu.dot_dimension_numbers<[1], [0], [0], [1], [0, 0, 1, 1], [], []>} : vector<8x72xf32>, vector<72x288xf32>, vector<8x288xf32> -> vector<8x288xf32>
    %55 = arith.maximumf %43, %54 : vector<8x288xf32>
    %56 = vector.extract_strided_slice %27 {offsets = [0, 0], sizes = [8, 288], strides = [1, 1]} : vector<8x324xf32> to vector<8x288xf32>
    %57 = vector.extract_strided_slice %31 {offsets = [0, 0], sizes = [8, 288], strides = [1, 1]} : vector<8x324xf32> to vector<8x288xf32>
    %58 = vector.extract_strided_slice %27 {offsets = [0, 1], sizes = [8, 288], strides = [1, 1]} : vector<8x324xf32> to vector<8x288xf32>
    %59 = vector.extract_strided_slice %19 {offsets = [0, 18], sizes = [8, 288], strides = [1, 1]} : vector<8x324xf32> to vector<8x288xf32>
    %60 = vector.extract_strided_slice %23 {offsets = [0, 18], sizes = [8, 288], strides = [1, 1]} : vector<8x324xf32> to vector<8x288xf32>
    %61 = vector.extract_strided_slice %19 {offsets = [0, 19], sizes = [8, 288], strides = [1, 1]} : vector<8x324xf32> to vector<8x288xf32>
    %62 = vector.extract_strided_slice %27 {offsets = [0, 18], sizes = [8, 288], strides = [1, 1]} : vector<8x324xf32> to vector<8x288xf32>
    %63 = vector.extract_strided_slice %31 {offsets = [0, 18], sizes = [8, 288], strides = [1, 1]} : vector<8x324xf32> to vector<8x288xf32>
    %64 = vector.extract_strided_slice %27 {offsets = [0, 19], sizes = [8, 288], strides = [1, 1]} : vector<8x324xf32> to vector<8x288xf32>
    %65 = tpu.concatenate %56, %57, %58, %59, %60, %61, %62, %63, %64 in 0 : vector<8x288xf32>, vector<8x288xf32>, vector<8x288xf32>, vector<8x288xf32>, vector<8x288xf32>, vector<8x288xf32>, vector<8x288xf32>, vector<8x288xf32>, vector<8x288xf32> -> vector<72x288xf32>
    %cst_25 = arith.constant dense<0.000000e+00> : vector<8x288xf32>
    %66 = tpu.matmul %32, %65, %cst_25 {dimension_numbers = #tpu.dot_dimension_numbers<[1], [0], [0], [1], [0, 0, 1, 1], [], []>} : vector<8x72xf32>, vector<72x288xf32>, vector<8x288xf32> -> vector<8x288xf32>
    %67 = arith.maximumf %55, %66 : vector<8x288xf32>
    %68 = vector.extract_strided_slice %31 {offsets = [0, 0], sizes = [8, 288], strides = [1, 1]} : vector<8x324xf32> to vector<8x288xf32>
    %69 = vector.extract_strided_slice %27 {offsets = [0, 1], sizes = [8, 288], strides = [1, 1]} : vector<8x324xf32> to vector<8x288xf32>
    %70 = vector.extract_strided_slice %31 {offsets = [0, 1], sizes = [8, 288], strides = [1, 1]} : vector<8x324xf32> to vector<8x288xf32>
    %71 = vector.extract_strided_slice %23 {offsets = [0, 18], sizes = [8, 288], strides = [1, 1]} : vector<8x324xf32> to vector<8x288xf32>
    %72 = vector.extract_strided_slice %19 {offsets = [0, 19], sizes = [8, 288], strides = [1, 1]} : vector<8x324xf32> to vector<8x288xf32>
    %73 = vector.extract_strided_slice %23 {offsets = [0, 19], sizes = [8, 288], strides = [1, 1]} : vector<8x324xf32> to vector<8x288xf32>
    %74 = vector.extract_strided_slice %31 {offsets = [0, 18], sizes = [8, 288], strides = [1, 1]} : vector<8x324xf32> to vector<8x288xf32>
    %75 = vector.extract_strided_slice %27 {offsets = [0, 19], sizes = [8, 288], strides = [1, 1]} : vector<8x324xf32> to vector<8x288xf32>
    %76 = vector.extract_strided_slice %31 {offsets = [0, 19], sizes = [8, 288], strides = [1, 1]} : vector<8x324xf32> to vector<8x288xf32>
    %77 = tpu.concatenate %68, %69, %70, %71, %72, %73, %74, %75, %76 in 0 : vector<8x288xf32>, vector<8x288xf32>, vector<8x288xf32>, vector<8x288xf32>, vector<8x288xf32>, vector<8x288xf32>, vector<8x288xf32>, vector<8x288xf32>, vector<8x288xf32> -> vector<72x288xf32>
    %cst_26 = arith.constant dense<0.000000e+00> : vector<8x288xf32>
    %78 = tpu.matmul %32, %77, %cst_26 {dimension_numbers = #tpu.dot_dimension_numbers<[1], [0], [0], [1], [0, 0, 1, 1], [], []>} : vector<8x72xf32>, vector<72x288xf32>, vector<8x288xf32> -> vector<8x288xf32>
    %79 = arith.maximumf %67, %78 : vector<8x288xf32>
    %c0_27 = arith.constant 0 : index
    %c0_28 = arith.constant 0 : index
    %80 = vector.load %arg7[%c0_27, %c0_28] : memref<8x1xf32, #tpu.memory_space<vmem>>, vector<8x1xf32>
    %81 = vector.broadcast %80 : vector<8x1xf32> to vector<8x288xf32>
    %82 = arith.addf %79, %81 : vector<8x288xf32>
    %83 = arith.addf %82, %15 : vector<8x288xf32>
    %c0_29 = arith.constant 0 : index
    %c0_30 = arith.constant 0 : index
    %84 = vector.load %arg9[%c0_29, %c0_30] : memref<8x1xf32, #tpu.memory_space<vmem>>, vector<8x1xf32>
    %85 = vector.broadcast %84 : vector<8x1xf32> to vector<8x288xf32>
    %86 = arith.addf %83, %85 : vector<8x288xf32>
    %cst_31 = arith.constant 0.000000e+00 : f32
    %87 = vector.broadcast %cst_31 : f32 to vector<8x288xf32>
    %88 = arith.maximumf %86, %87 : vector<8x288xf32>
    %c0_32 = arith.constant 0 : index
    %c0_33 = arith.constant 0 : index
    %89 = vector.load %arg10[%c0_32, %c0_33] : memref<8x1xf32, #tpu.memory_space<vmem>>, vector<8x1xf32>
    %90 = vector.broadcast %89 : vector<8x1xf32> to vector<8x288xf32>
    %91 = arith.mulf %88, %90 : vector<8x288xf32>
    %cst_34 = arith.constant dense<0.000000e+00> : vector<288xf32>
    %92 = vector.multi_reduction <add>, %91, %cst_34 [0] : vector<8x288xf32> to vector<288xf32>
    %93 = vector.shape_cast %92 : vector<288xf32> to vector<1x288xf32>
    %c0_35 = arith.constant 0 : index
    %c0_36 = arith.constant 0 : index
    %94 = vector.load %arg11[%c0_35, %c0_36] : memref<1x1xf32, #tpu.memory_space<vmem>>, vector<1x1xf32>
    %95 = vector.broadcast %94 : vector<1x1xf32> to vector<1x288xf32>
    %96 = arith.addf %93, %95 : vector<1x288xf32>
    %97 = vector.extract_strided_slice %1 {offsets = [0, 19], sizes = [8, 288], strides = [1, 1]} : vector<8x342xf32> to vector<8x288xf32>
    %98 = vector.broadcast %96 : vector<1x288xf32> to vector<8x288xf32>
    %99 = arith.mulf %97, %98 : vector<8x288xf32>
    %c0_37 = arith.constant 0 : index
    %c0_38 = arith.constant 0 : index
    %c0_39 = arith.constant 0 : index
    %100 = vector.load %arg12[%c0_37, %c0_38, %c0_39] : memref<1x8x288xf32, #tpu.memory_space<vmem>>, vector<1x8x288xf32>
    %101 = vector.shape_cast %100 : vector<1x8x288xf32> to vector<8x288xf32>
    %102 = vector.shape_cast %99 : vector<8x288xf32> to vector<1x8x288xf32>
    tpu.vector_store %arg12[%c0_37, %c0_38, %c0_39], %102 {strides = array<i32>} : memref<1x8x288xf32, #tpu.memory_space<vmem>>, vector<1x8x288xf32>,
    return
  }
  func.func @transform_0(%arg0: i32) -> (i32, i32, i32) {
    %c0_i32 = arith.constant 0 : i32
    %c0_i32_0 = arith.constant 0 : i32
    %c0_i32_1 = arith.constant 0 : i32
    return %arg0, %c0_i32, %c0_i32_0 : i32, i32, i32
  }
  func.func @transform_1(%arg0: i32) -> (i32, i32, i32) {
    %c0_i32 = arith.constant 0 : i32
    %c0_i32_0 = arith.constant 0 : i32
    %c0_i32_1 = arith.constant 0 : i32
    return %arg0, %c0_i32, %c0_i32_0 : i32, i32, i32
  }
  func.func @transform_2(%arg0: i32) -> (i32, i32, i32) {
    %c0_i32 = arith.constant 0 : i32
    %c0_i32_0 = arith.constant 0 : i32
    %c0_i32_1 = arith.constant 0 : i32
    return %arg0, %c0_i32, %c0_i32_0 : i32, i32, i32
  }
  func.func @transform_3(%arg0: i32) -> (i32, i32, i32) {
    %c0_i32 = arith.constant 0 : i32
    %c0_i32_0 = arith.constant 0 : i32
    %c0_i32_1 = arith.constant 0 : i32
    return %arg0, %c0_i32, %c0_i32_0 : i32, i32, i32
  }
  func.func @transform_4(%arg0: i32) -> (i32, i32, i32) {
    %c0_i32 = arith.constant 0 : i32
    %c0_i32_0 = arith.constant 0 : i32
    %c0_i32_1 = arith.constant 0 : i32
    return %arg0, %c0_i32, %c0_i32_0 : i32, i32, i32
  }
  func.func @transform_5(%arg0: i32) -> (i32, i32) {
    %c0_i32 = arith.constant 0 : i32
    %c0_i32_0 = arith.constant 0 : i32
    %c0_i32_1 = arith.constant 0 : i32
    return %c0_i32, %c0_i32_0 : i32, i32
  }
  func.func @transform_6(%arg0: i32) -> (i32, i32) {
    %c0_i32 = arith.constant 0 : i32
    %c0_i32_0 = arith.constant 0 : i32
    %c0_i32_1 = arith.constant 0 : i32
    return %c0_i32, %c0_i32_0 : i32, i32
  }
  func.func @transform_7(%arg0: i32) -> (i32, i32) {
    %c0_i32 = arith.constant 0 : i32
    %c0_i32_0 = arith.constant 0 : i32
    %c0_i32_1 = arith.constant 0 : i32
    return %c0_i32, %c0_i32_0 : i32, i32
  }
  func.func @transform_8(%arg0: i32) -> (i32, i32) {
    %c0_i32 = arith.constant 0 : i32
    %c0_i32_0 = arith.constant 0 : i32
    %c0_i32_1 = arith.constant 0 : i32
    return %c0_i32, %c0_i32_0 : i32, i32
  }
  func.func @transform_9(%arg0: i32) -> (i32, i32) {
    %c0_i32 = arith.constant 0 : i32
    %c0_i32_0 = arith.constant 0 : i32
    %c0_i32_1 = arith.constant 0 : i32
    return %c0_i32, %c0_i32_0 : i32, i32
  }
  func.func @transform_10(%arg0: i32) -> (i32, i32) {
    %c0_i32 = arith.constant 0 : i32
    %c0_i32_0 = arith.constant 0 : i32
    %c0_i32_1 = arith.constant 0 : i32
    return %c0_i32, %c0_i32_0 : i32, i32
  }
  func.func @transform_11(%arg0: i32) -> (i32, i32, i32) {
    %c0_i32 = arith.constant 0 : i32
    %c0_i32_0 = arith.constant 0 : i32
    %c0_i32_1 = arith.constant 0 : i32
    return %arg0, %c0_i32, %c0_i32_0 : i32, i32, i32
  }
}

</mosaic_0001>

<llo_original>
// kernel: tpu_custom_call.1
$region0: #{tpu_custom_call.1}
  #allocation0 [shape = 'u32[]', space=smem, size = 0x4, offset = 0x4, fixed_abs, tag = 'smem constant byte address 0x4 - core index']
  #allocation1 [shape = 'u32[144,128]{1,0:T(1,128)}', space=vmem, size = 0x12000, scoped, tag = 'internal scratch']
  #allocation2 [shape = 'f32[1,1]{1,0:T(1,128)S(1)}', space=vmem, size = 0x200, scoped, tag = 'scoped memory for tpu_custom_call.1']
  %s0 = inlined_call_operand.hbm [shape: f32[2,8,324], index: 0, kind: input, shape index: {}]
  %s1 = inlined_call_operand.hbm [shape: f32[2,8,324], index: 1, kind: input, shape index: {}]
  %s2 = inlined_call_operand.hbm [shape: f32[2,8,324], index: 2, kind: input, shape index: {}]
  %s3 = inlined_call_operand.hbm [shape: f32[2,8,324], index: 3, kind: input, shape index: {}]
  %s4 = inlined_call_operand.hbm [shape: f32[2,8,342], index: 4, kind: input, shape index: {}]
  %s5 = inlined_call_operand.vmem [shape: f32[8,72], index: 5, kind: input, shape index: {}]
  %s6 = inlined_call_operand.vmem [shape: f32[8,1], index: 6, kind: input, shape index: {}]
  %s7 = inlined_call_operand.vmem [shape: f32[8,72], index: 7, kind: input, shape index: {}]
  %s8 = inlined_call_operand.vmem [shape: f32[8,1], index: 8, kind: input, shape index: {}]
  %s9 = inlined_call_operand.vmem [shape: f32[8,1], index: 9, kind: input, shape index: {}]
  %s10 = inlined_call_operand.<no memory space> [shape: f32[1,1], index: 10, kind: input, shape index: {}]
  %s11 = inlined_call_operand.hbm [shape: f32[2,8,288], index: 11, kind: output, shape index: {}]
  %s12 = sld [smem:[#allocation0]]
  $region97: #{tpu_custom_call.1} parent=0
    _
  %s14 = ssub.s32 1, %s12
  %s15 = scalar_select 0, %s14, %s12
  %v16 = vstv %s10
  %17 = vst [vmem:[#allocation2] sm:$0x1] %v16
  $region1: #{tpu_custom_call.1} parent=0
    #allocation3 [shape = 'u8[24576]{0}', space=vmem, size = 0x6000, scoped, tag = 'input window, operand 0']
    #allocation4 [shape = 's32[2]{0}', space=sflag, size = 0x8, scoped, tag = 'scoped memory for tpu_custom_call.1']
    #allocation5 [shape = 's32[2]{0}', space=sflag, size = 0x8, scoped, tag = 'scoped memory for tpu_custom_call.1']
    #allocation6 [shape = 'u8[24576]{0}', space=vmem, size = 0x6000, scoped, tag = 'input window, operand 1']
    #allocation7 [shape = 's32[2]{0}', space=sflag, size = 0x8, scoped, tag = 'scoped memory for tpu_custom_call.1']
    #allocation8 [shape = 'u8[24576]{0}', space=vmem, size = 0x6000, scoped, tag = 'input window, operand 2']
    #allocation9 [shape = 'u8[24576]{0}', space=vmem, size = 0x6000, scoped, tag = 'input window, operand 3']
    #allocation10 [shape = 's32[2]{0}', space=sflag, size = 0x8, scoped, tag = 'scoped memory for tpu_custom_call.1']
    #allocation11 [shape = 'u8[24576]{0}', space=vmem, size = 0x6000, scoped, tag = 'input window, operand 4']
    #allocation12 [shape = 'u8[24576]{0}', space=vmem, size = 0x6000, scoped, tag = 'output window, operand 0']
    %18 = vsyncpa [#allocation4], 0
    %s19 = scalar_lea.sflag [#allocation4], 1
    %20 = vsyncpa %s19, 0
    %21 = vsyncpa [#allocation7], 0
    %s22 = scalar_lea.sflag [#allocation7], 1
    %23 = vsyncpa %s22, 0
    %24 = vsyncpa [#allocation10], 0
    %s25 = scalar_lea.sflag [#allocation10], 1
    %26 = vsyncpa %s25, 0
    %27 = vsyncpa [#allocation5], 0
    %s28 = scalar_lea.sflag [#allocation5], 1
    %29 = vsyncpa %s28, 0
    loop: start=0, step=1, limit=4
    $region2: #{tpu_custom_call.1} parent=1 // loop_pre_header
      _
    $region3: #{tpu_custom_call.1} parent=1 // loop_header
      %s31 = sphi 0, %s35
      %p32 = scmp.ge.s32.totalorder %s31, 4
      %s41 = sphi 0, %s43
      %s44 = sphi 0, %s41
      %s45 = sphi 0, %s44
      %s61 = sphi 0, %s45
      %s67 = sphi 0, %s69
      %s70 = sphi 0, %s67
      %s71 = sphi 0, %s70
      %s87 = sphi 0, %s71
      %s93 = sphi 0, %s95
      %s96 = sphi 0, %s93
      %s97 = sphi 0, %s96
      %s113 = sphi 0, %s97
      %s119 = sphi 0, %s121
      %s122 = sphi 0, %s119
      %s123 = sphi 0, %s122
      %s139 = sphi 0, %s123
      %s145 = sphi 0, %s147
      %s148 = sphi 0, %s145
      %s149 = sphi 0, %s148
      %s165 = sphi 0, %s149
      %s169 = sphi 0, %s169
      %s171 = sphi 0, %s169
      %s172 = sphi 0, %s171
      %s186 = sphi 0, %s172
      %s190 = sphi 0, %s190
      %s192 = sphi 0, %s190
      %s193 = sphi 0, %s192
      %s207 = sphi 0, %s193
      %s211 = sphi 0, %s211
      %s213 = sphi 0, %s211
      %s214 = sphi 0, %s213
      %s228 = sphi 0, %s214
      %s232 = sphi 0, %s232
      %s234 = sphi 0, %s232
      %s235 = sphi 0, %s234
      %s249 = sphi 0, %s235
      %s253 = sphi 0, %s253
      %s255 = sphi 0, %s253
      %s256 = sphi 0, %s255
      %s270 = sphi 0, %s256
      %s274 = sphi 0, %s274
      %s276 = sphi 0, %s274
      %s277 = sphi 0, %s276
      %s291 = sphi 0, %s277
      %s297 = sphi 0, %s299
      %s300 = sphi 0, %s297
      %s301 = sphi 0, %s300
      %s317 = sphi 0, %s301
    $region4: #{tpu_custom_call.1} parent=1 // loop_header_branch
      %34 = sbr.rel (%p32) target = $region8
    $region5: #{tpu_custom_call.1} parent=1 // loop_body
      %s36 = ssub.s32 %s31, 1
      %s37 = ssub.s32 %s31, 2
      %s38 = sadd.s32 %s31, 1
      %s39 = ssub.s32 %s31, %s38
      %p40 = scmp.eq.s32.totalorder %s39, 0
      %s42 = sadd.s32 %s41, 1
      %s43 = scalar_select %p40, %s41, %s42
      %p46 = pneg %p40
      %p47 = scmp.eq.s32.totalorder %s31, 1
      %p48 = por %p46, %p47
      %p49 = scmp.ne.s32.totalorder %s41, %s44
      %p50 = scmp.eq.s32.totalorder %s31, 0
      %p51 = por %p49, %p50
      %p52 = scmp.ne.s32.totalorder %s41, %s44
      %p53 = scmp.eq.s32.totalorder %s36, 1
      %p54 = por %p52, %p53
      %p55 = scmp.ne.s32.totalorder %s44, %s45
      %p56 = scmp.eq.s32.totalorder %s36, 0
      %p57 = por %p55, %p56
      %p58 = scmp.ne.s32.totalorder %s44, %s45
      %p59 = scmp.eq.s32.totalorder %s37, 1
      %p60 = por %p58, %p59
      %p62 = scmp.ne.s32.totalorder %s45, %s61
      %p63 = scmp.eq.s32.totalorder %s37, 0
      %p64 = por %p62, %p63
      %s65 = ssub.s32 %s31, %s38
      %p66 = scmp.eq.s32.totalorder %s65, 0
      %s68 = sadd.s32 %s67, 1
      %s69 = scalar_select %p66, %s67, %s68
      %p72 = pneg %p66
      %p73 = scmp.eq.s32.totalorder %s31, 1
      %p74 = por %p72, %p73
      %p75 = scmp.ne.s32.totalorder %s67, %s70
      %p76 = scmp.eq.s32.totalorder %s31, 0
      %p77 = por %p75, %p76
      %p78 = scmp.ne.s32.totalorder %s67, %s70
      %p79 = scmp.eq.s32.totalorder %s36, 1
      %p80 = por %p78, %p79
      %p81 = scmp.ne.s32.totalorder %s70, %s71
      %p82 = scmp.eq.s32.totalorder %s36, 0
      %p83 = por %p81, %p82
      %p84 = scmp.ne.s32.totalorder %s70, %s71
      %p85 = scmp.eq.s32.totalorder %s37, 1
      %p86 = por %p84, %p85
      %p88 = scmp.ne.s32.totalorder %s71, %s87
      %p89 = scmp.eq.s32.totalorder %s37, 0
      %p90 = por %p88, %p89
      %s91 = ssub.s32 %s31, %s38
      %p92 = scmp.eq.s32.totalorder %s91, 0
      %s94 = sadd.s32 %s93, 1
      %s95 = scalar_select %p92, %s93, %s94
      %p98 = pneg %p92
      %p99 = scmp.eq.s32.totalorder %s31, 1
      %p100 = por %p98, %p99
      %p101 = scmp.ne.s32.totalorder %s93, %s96
      %p102 = scmp.eq.s32.totalorder %s31, 0
      %p103 = por %p101, %p102
      %p104 = scmp.ne.s32.totalorder %s93, %s96
      %p105 = scmp.eq.s32.totalorder %s36, 1
      %p106 = por %p104, %p105
      %p107 = scmp.ne.s32.totalorder %s96, %s97
      %p108 = scmp.eq.s32.totalorder %s36, 0
      %p109 = por %p107, %p108
      %p110 = scmp.ne.s32.totalorder %s96, %s97
      %p111 = scmp.eq.s32.totalorder %s37, 1
      %p112 = por %p110, %p111
      %p114 = scmp.ne.s32.totalorder %s97, %s113
      %p115 = scmp.eq.s32.totalorder %s37, 0
      %p116 = por %p114, %p115
      %s117 = ssub.s32 %s31, %s38
      %p118 = scmp.eq.s32.totalorder %s117, 0
      %s120 = sadd.s32 %s119, 1
      %s121 = scalar_select %p118, %s119, %s120
      %p124 = pneg %p118
      %p125 = scmp.eq.s32.totalorder %s31, 1
      %p126 = por %p124, %p125
      %p127 = scmp.ne.s32.totalorder %s119, %s122
      %p128 = scmp.eq.s32.totalorder %s31, 0
      %p129 = por %p127, %p128
      %p130 = scmp.ne.s32.totalorder %s119, %s122
      %p131 = scmp.eq.s32.totalorder %s36, 1
      %p132 = por %p130, %p131
      %p133 = scmp.ne.s32.totalorder %s122, %s123
      %p134 = scmp.eq.s32.totalorder %s36, 0
      %p135 = por %p133, %p134
      %p136 = scmp.ne.s32.totalorder %s122, %s123
      %p137 = scmp.eq.s32.totalorder %s37, 1
      %p138 = por %p136, %p137
      %p140 = scmp.ne.s32.totalorder %s123, %s139
      %p141 = scmp.eq.s32.totalorder %s37, 0
      %p142 = por %p140, %p141
      %s143 = ssub.s32 %s31, %s38
      %p144 = scmp.eq.s32.totalorder %s143, 0
      %s146 = sadd.s32 %s145, 1
      %s147 = scalar_select %p144, %s145, %s146
      %p150 = pneg %p144
      %p151 = scmp.eq.s32.totalorder %s31, 1
      %p152 = por %p150, %p151
      %p153 = scmp.ne.s32.totalorder %s145, %s148
      %p154 = scmp.eq.s32.totalorder %s31, 0
      %p155 = por %p153, %p154
      %p156 = scmp.ne.s32.totalorder %s145, %s148
      %p157 = scmp.eq.s32.totalorder %s36, 1
      %p158 = por %p156, %p157
      %p159 = scmp.ne.s32.totalorder %s148, %s149
      %p160 = scmp.eq.s32.totalorder %s36, 0
      %p161 = por %p159, %p160
      %p162 = scmp.ne.s32.totalorder %s148, %s149
      %p163 = scmp.eq.s32.totalorder %s37, 1
      %p164 = por %p162, %p163
      %p166 = scmp.ne.s32.totalorder %s149, %s165
      %p167 = scmp.eq.s32.totalorder %s37, 0
      %p168 = por %p166, %p167
      %s170 = sadd.s32 %s169, 1
      %p173 = scmp.eq.s32.totalorder %s31, 1
      %p174 = scmp.ne.s32.totalorder %s169, %s171
      %p175 = scmp.eq.s32.totalorder %s31, 0
      %p176 = por %p174, %p175
      %p177 = scmp.ne.s32.totalorder %s169, %s171
      %p178 = scmp.eq.s32.totalorder %s36, 1
      %p179 = por %p177, %p178
      %p180 = scmp.ne.s32.totalorder %s171, %s172
      %p181 = scmp.eq.s32.totalorder %s36, 0
      %p182 = por %p180, %p181
      %p183 = scmp.ne.s32.totalorder %s171, %s172
      %p184 = scmp.eq.s32.totalorder %s37, 1
      %p185 = por %p183, %p184
      %p187 = scmp.ne.s32.totalorder %s172, %s186
      %p188 = scmp.eq.s32.totalorder %s37, 0
      %p189 = por %p187, %p188
      %s191 = sadd.s32 %s190, 1
      %p194 = scmp.eq.s32.totalorder %s31, 1
      %p195 = scmp.ne.s32.totalorder %s190, %s192
      %p196 = scmp.eq.s32.totalorder %s31, 0
      %p197 = por %p195, %p196
      %p198 = scmp.ne.s32.totalorder %s190, %s192
      %p199 = scmp.eq.s32.totalorder %s36, 1
      %p200 = por %p198, %p199
      %p201 = scmp.ne.s32.totalorder %s192, %s193
      %p202 = scmp.eq.s32.totalorder %s36, 0
      %p203 = por %p201, %p202
      %p204 = scmp.ne.s32.totalorder %s192, %s193
      %p205 = scmp.eq.s32.totalorder %s37, 1
      %p206 = por %p204, %p205
      %p208 = scmp.ne.s32.totalorder %s193, %s207
      %p209 = scmp.eq.s32.totalorder %s37, 0
      %p210 = por %p208, %p209
      %s212 = sadd.s32 %s211, 1
      %p215 = scmp.eq.s32.totalorder %s31, 1
      %p216 = scmp.ne.s32.totalorder %s211, %s213
      %p217 = scmp.eq.s32.totalorder %s31, 0
      %p218 = por %p216, %p217
      %p219 = scmp.ne.s32.totalorder %s211, %s213
      %p220 = scmp.eq.s32.totalorder %s36, 1
      %p221 = por %p219, %p220
      %p222 = scmp.ne.s32.totalorder %s213, %s214
      %p223 = scmp.eq.s32.totalorder %s36, 0
      %p224 = por %p222, %p223
      %p225 = scmp.ne.s32.totalorder %s213, %s214
      %p226 = scmp.eq.s32.totalorder %s37, 1
      %p227 = por %p225, %p226
      %p229 = scmp.ne.s32.totalorder %s214, %s228
      %p230 = scmp.eq.s32.totalorder %s37, 0
      %p231 = por %p229, %p230
      %s233 = sadd.s32 %s232, 1
      %p236 = scmp.eq.s32.totalorder %s31, 1
      %p237 = scmp.ne.s32.totalorder %s232, %s234
      %p238 = scmp.eq.s32.totalorder %s31, 0
      %p239 = por %p237, %p238
      %p240 = scmp.ne.s32.totalorder %s232, %s234
      %p241 = scmp.eq.s32.totalorder %s36, 1
      %p242 = por %p240, %p241
      %p243 = scmp.ne.s32.totalorder %s234, %s235
      %p244 = scmp.eq.s32.totalorder %s36, 0
      %p245 = por %p243, %p244
      %p246 = scmp.ne.s32.totalorder %s234, %s235
      %p247 = scmp.eq.s32.totalorder %s37, 1
      %p248 = por %p246, %p247
      %p250 = scmp.ne.s32.totalorder %s235, %s249
      %p251 = scmp.eq.s32.totalorder %s37, 0
      %p252 = por %p250, %p251
      %s254 = sadd.s32 %s253, 1
      %p257 = scmp.eq.s32.totalorder %s31, 1
      %p258 = scmp.ne.s32.totalorder %s253, %s255
      %p259 = scmp.eq.s32.totalorder %s31, 0
      %p260 = por %p258, %p259
      %p261 = scmp.ne.s32.totalorder %s253, %s255
      %p262 = scmp.eq.s32.totalorder %s36, 1
      %p263 = por %p261, %p262
      %p264 = scmp.ne.s32.totalorder %s255, %s256
      %p265 = scmp.eq.s32.totalorder %s36, 0
      %p266 = por %p264, %p265
      %p267 = scmp.ne.s32.totalorder %s255, %s256
      %p268 = scmp.eq.s32.totalorder %s37, 1
      %p269 = por %p267, %p268
      %p271 = scmp.ne.s32.totalorder %s256, %s270
      %p272 = scmp.eq.s32.totalorder %s37, 0
      %p273 = por %p271, %p272
      %s275 = sadd.s32 %s274, 1
      %p278 = scmp.eq.s32.totalorder %s31, 1
      %p279 = scmp.ne.s32.totalorder %s274, %s276
      %p280 = scmp.eq.s32.totalorder %s31, 0
      %p281 = por %p279, %p280
      %p282 = scmp.ne.s32.totalorder %s274, %s276
      %p283 = scmp.eq.s32.totalorder %s36, 1
      %p284 = por %p282, %p283
      %p285 = scmp.ne.s32.totalorder %s276, %s277
      %p286 = scmp.eq.s32.totalorder %s36, 0
      %p287 = por %p285, %p286
      %p288 = scmp.ne.s32.totalorder %s276, %s277
      %p289 = scmp.eq.s32.totalorder %s37, 1
      %p290 = por %p288, %p289
      %p292 = scmp.ne.s32.totalorder %s277, %s291
      %p293 = scmp.eq.s32.totalorder %s37, 0
      %p294 = por %p292, %p293
      %s295 = ssub.s32 %s31, %s38
      %p296 = scmp.eq.s32.totalorder %s295, 0
      %s298 = sadd.s32 %s297, 1
      %s299 = scalar_select %p296, %s297, %s298
      %p302 = pneg %p296
      %p303 = scmp.eq.s32.totalorder %s31, 1
      %p304 = por %p302, %p303
      %p305 = scmp.ne.s32.totalorder %s297, %s300
      %p306 = scmp.eq.s32.totalorder %s31, 0
      %p307 = por %p305, %p306
      %p308 = scmp.ne.s32.totalorder %s297, %s300
      %p309 = scmp.eq.s32.totalorder %s36, 1
      %p310 = por %p308, %p309
      %p311 = scmp.ne.s32.totalorder %s300, %s301
      %p312 = scmp.eq.s32.totalorder %s36, 0
      %p313 = por %p311, %p312
      %p314 = scmp.ne.s32.totalorder %s300, %s301
      %p315 = scmp.eq.s32.totalorder %s37, 1
      %p316 = por %p314, %p315
      %p318 = scmp.ne.s32.totalorder %s301, %s317
      %p319 = scmp.eq.s32.totalorder %s37, 0
      %p320 = por %p318, %p319
      %p321 = scmp.le.s32.totalorder 1, %s31
      %p322 = scmp.lt.s32.totalorder %s31, 3
      %p323 = pnand %p321, %p322
      %p324 = pneg %p323
      // Predicated region
      $region9: #{tpu_custom_call.1} parent=5 // pred_check
        _
      $region10: #{tpu_custom_call.1} parent=5 // pred_check_branch
        %326 = sbr.rel (%p323) target = $region12
      $region11: #{tpu_custom_call.1} parent=5 // pred_region
        %s327 = ssub.s32 %s31, 1
        // Predicated region
        $region13: #{tpu_custom_call.1} parent=11 // pred_check
          %p328 = pneg %p182
        $region14: #{tpu_custom_call.1} parent=11 // pred_check_branch
          %330 = sbr.rel (%p328) target = $region16
        $region15: #{tpu_custom_call.1} parent=11 // pred_region
          _
        $region16: #{tpu_custom_call.1} parent=11 // pred_fallthru
          _
        // Predicated region
        $region17: #{tpu_custom_call.1} parent=11 // pred_check
          %p331 = pneg %p203
        $region18: #{tpu_custom_call.1} parent=11 // pred_check_branch
          %333 = sbr.rel (%p331) target = $region20
        $region19: #{tpu_custom_call.1} parent=11 // pred_region
          _
        $region20: #{tpu_custom_call.1} parent=11 // pred_fallthru
          _
        // Predicated region
        $region21: #{tpu_custom_call.1} parent=11 // pred_check
          %p334 = pneg %p224
        $region22: #{tpu_custom_call.1} parent=11 // pred_check_branch
          %336 = sbr.rel (%p334) target = $region24
        $region23: #{tpu_custom_call.1} parent=11 // pred_region
          _
        $region24: #{tpu_custom_call.1} parent=11 // pred_fallthru
          _
        // Predicated region
        $region25: #{tpu_custom_call.1} parent=11 // pred_check
          %p337 = pneg %p245
        $region26: #{tpu_custom_call.1} parent=11 // pred_check_branch
          %339 = sbr.rel (%p337) target = $region28
        $region27: #{tpu_custom_call.1} parent=11 // pred_region
          _
        $region28: #{tpu_custom_call.1} parent=11 // pred_fallthru
          _
        // Predicated region
        $region29: #{tpu_custom_call.1} parent=11 // pred_check
          %p340 = pneg %p266
        $region30: #{tpu_custom_call.1} parent=11 // pred_check_branch
          %342 = sbr.rel (%p340) target = $region32
        $region31: #{tpu_custom_call.1} parent=11 // pred_region
          _
        $region32: #{tpu_custom_call.1} parent=11 // pred_fallthru
          _
        // Predicated region
        $region33: #{tpu_custom_call.1} parent=11 // pred_check
          %p343 = pneg %p287
        $region34: #{tpu_custom_call.1} parent=11 // pred_check_branch
          %345 = sbr.rel (%p343) target = $region36
        $region35: #{tpu_custom_call.1} parent=11 // pred_region
          _
        $region36: #{tpu_custom_call.1} parent=11 // pred_fallthru
          _
      $region12: #{tpu_custom_call.1} parent=5 // pred_fallthru
        _
      %p346 = scmp.lt.s32.totalorder %s31, 2
      // Predicated region
      $region37: #{tpu_custom_call.1} parent=5 // pred_check
        %p347 = pneg %p346
      $region38: #{tpu_custom_call.1} parent=5 // pred_check_branch
        %349 = sbr.rel (%p347) target = $region40
      $region39: #{tpu_custom_call.1} parent=5 // pred_region
        // Predicated region
        $region41: #{tpu_custom_call.1} parent=39 // pred_check
          %p350 = pneg %p51
        $region42: #{tpu_custom_call.1} parent=39 // pred_check_branch
          %352 = sbr.rel (%p350) target = $region44
        $region43: #{tpu_custom_call.1} parent=39 // pred_region
          %s353 = sand.u32 %s41, 1
          %s354 = scalar_lea.sflag [#allocation4], %s353
          %s355 = sand.u32 %s41, 1
          %s356 = smul.addr %s355, 24
          %s357 = scalar_lea.vmem [#allocation3], %s356
          %s359 = ssub.s32 384, 384
          %360 = vsyncadd %s354, %s359
          %s361 = smul.addr %s31, 3
          %s362 = smul.addr %s361, 128
          %s363 = scalar_lea.hbm %s0, %s362
          %s365 = sshll.u32 %s357, 4
          %s366 = int_to_ptr.vmem [resolvable:$true] %s365
          %368 = dma.hbm_to_vmem [thread:$0]  %s363, 384, %s366, %s354
        $region44: #{tpu_custom_call.1} parent=39 // pred_fallthru
          _
        // Predicated region
        $region45: #{tpu_custom_call.1} parent=39 // pred_check
          %p369 = pneg %p77
        $region46: #{tpu_custom_call.1} parent=39 // pred_check_branch
          %371 = sbr.rel (%p369) target = $region48
        $region47: #{tpu_custom_call.1} parent=39 // pred_region
          %s372 = sand.u32 %s31, 1
          %s373 = scalar_lea.sflag [#allocation7], %s372
          %s374 = sand.u32 %s67, 1
          %s375 = smul.addr %s374, 24
          %s376 = scalar_lea.vmem [#allocation6], %s375
          %s378 = ssub.s32 384, 384
          %379 = vsyncadd %s373, %s378
          %s380 = smul.addr %s31, 3
          %s381 = smul.addr %s380, 128
          %s382 = scalar_lea.hbm %s1, %s381
          %s384 = sshll.u32 %s376, 4
          %s385 = int_to_ptr.vmem [resolvable:$true] %s384
          %387 = dma.hbm_to_vmem [thread:$0]  %s382, 384, %s385, %s373
        $region48: #{tpu_custom_call.1} parent=39 // pred_fallthru
          _
        // Predicated region
        $region49: #{tpu_custom_call.1} parent=39 // pred_check
          %p388 = pneg %p103
        $region50: #{tpu_custom_call.1} parent=39 // pred_check_branch
          %390 = sbr.rel (%p388) target = $region52
        $region51: #{tpu_custom_call.1} parent=39 // pred_region
          %s391 = sand.u32 %s31, 1
          %s392 = scalar_lea.sflag [#allocation7], %s391
          %s393 = sand.u32 %s93, 1
          %s394 = smul.addr %s393, 24
          %s395 = scalar_lea.vmem [#allocation8], %s394
          %s397 = ssub.s32 384, 384
          %398 = vsyncadd %s392, %s397
          %s399 = smul.addr %s31, 3
          %s400 = smul.addr %s399, 128
          %s401 = scalar_lea.hbm %s2, %s400
          %s403 = sshll.u32 %s395, 4
          %s404 = int_to_ptr.vmem [resolvable:$true] %s403
          %406 = dma.hbm_to_vmem [thread:$0]  %s401, 384, %s404, %s392
        $region52: #{tpu_custom_call.1} parent=39 // pred_fallthru
          _
        // Predicated region
        $region53: #{tpu_custom_call.1} parent=39 // pred_check
          %p407 = pneg %p129
        $region54: #{tpu_custom_call.1} parent=39 // pred_check_branch
          %409 = sbr.rel (%p407) target = $region56
        $region55: #{tpu_custom_call.1} parent=39 // pred_region
          %s410 = sand.u32 %s31, 1
          %s411 = scalar_lea.sflag [#allocation10], %s410
          %s412 = sand.u32 %s119, 1
          %s413 = smul.addr %s412, 24
          %s414 = scalar_lea.vmem [#allocation9], %s413
          %s416 = ssub.s32 384, 384
          %417 = vsyncadd %s411, %s416
          %s418 = smul.addr %s31, 3
          %s419 = smul.addr %s418, 128
          %s420 = scalar_lea.hbm %s3, %s419
          %s422 = sshll.u32 %s414, 4
          %s423 = int_to_ptr.vmem [resolvable:$true] %s422
          %425 = dma.hbm_to_vmem [thread:$0]  %s420, 384, %s423, %s411
        $region56: #{tpu_custom_call.1} parent=39 // pred_fallthru
          _
        // Predicated region
        $region57: #{tpu_custom_call.1} parent=39 // pred_check
          %p426 = pneg %p155
        $region58: #{tpu_custom_call.1} parent=39 // pred_check_branch
          %428 = sbr.rel (%p426) target = $region60
        $region59: #{tpu_custom_call.1} parent=39 // pred_region
          %s429 = sand.u32 %s31, 1
          %s430 = scalar_lea.sflag [#allocation10], %s429
          %s431 = sand.u32 %s145, 1
          %s432 = smul.addr %s431, 24
          %s433 = scalar_lea.vmem [#allocation11], %s432
          %s435 = ssub.s32 384, 384
          %436 = vsyncadd %s430, %s435
          %s437 = smul.addr %s31, 3
          %s438 = smul.addr %s437, 128
          %s439 = scalar_lea.hbm %s4, %s438
          %s441 = sshll.u32 %s433, 4
          %s442 = int_to_ptr.vmem [resolvable:$true] %s441
          %444 = dma.hbm_to_vmem [thread:$0]  %s439, 384, %s442, %s430
        $region60: #{tpu_custom_call.1} parent=39 // pred_fallthru
          _
      $region40: #{tpu_custom_call.1} parent=5 // pred_fallthru
        _
      %p445 = scmp.le.s32.totalorder 1, %s31
      %p446 = scmp.lt.s32.totalorder %s31, 3
      %p447 = pnand %p445, %p446
      %p448 = pneg %p447
      // Predicated region
      $region61: #{tpu_custom_call.1} parent=5 // pred_check
        _
      $region62: #{tpu_custom_call.1} parent=5 // pred_check_branch
        %450 = sbr.rel (%p447) target = $region64
      $region63: #{tpu_custom_call.1} parent=5 // pred_region
        %s451 = ssub.s32 %s31, 1
        %s452 = sand.u32 %s44, 1
        %s453 = scalar_lea.sflag [#allocation4], %s452
        %s454 = sand.u32 %s44, 1
        %s455 = smul.addr %s454, 24
        %s456 = scalar_lea.vmem [#allocation3], %s455
        // Predicated region
        $region65: #{tpu_custom_call.1} parent=63 // pred_check
          %p457 = pneg %p57
        $region66: #{tpu_custom_call.1} parent=63 // pred_check_branch
          %459 = sbr.rel (%p457) target = $region68
        $region67: #{tpu_custom_call.1} parent=63 // pred_region
          %460 = dma.done %s453, 384
        $region68: #{tpu_custom_call.1} parent=63 // pred_fallthru
          _
        %s461 = sand.u32 %s36, 1
        %s462 = scalar_lea.sflag [#allocation7], %s461
        %s463 = sand.u32 %s70, 1
        %s464 = smul.addr %s463, 24
        %s465 = scalar_lea.vmem [#allocation6], %s464
        // Predicated region
        $region69: #{tpu_custom_call.1} parent=63 // pred_check
          %p466 = pneg %p83
        $region70: #{tpu_custom_call.1} parent=63 // pred_check_branch
          %468 = sbr.rel (%p466) target = $region72
        $region71: #{tpu_custom_call.1} parent=63 // pred_region
          %469 = dma.done %s462, 384
        $region72: #{tpu_custom_call.1} parent=63 // pred_fallthru
          _
        %s470 = sand.u32 %s36, 1
        %s471 = scalar_lea.sflag [#allocation7], %s470
        %s472 = sand.u32 %s96, 1
        %s473 = smul.addr %s472, 24
        %s474 = scalar_lea.vmem [#allocation8], %s473
        // Predicated region
        $region73: #{tpu_custom_call.1} parent=63 // pred_check
          %p475 = pneg %p109
        $region74: #{tpu_custom_call.1} parent=63 // pred_check_branch
          %477 = sbr.rel (%p475) target = $region76
        $region75: #{tpu_custom_call.1} parent=63 // pred_region
          %478 = dma.done %s471, 384
        $region76: #{tpu_custom_call.1} parent=63 // pred_fallthru
          _
        %s479 = sand.u32 %s36, 1
        %s480 = scalar_lea.sflag [#allocation10], %s479
        %s481 = sand.u32 %s122, 1
        %s482 = smul.addr %s481, 24
        %s483 = scalar_lea.vmem [#allocation9], %s482
        // Predicated region
        $region77: #{tpu_custom_call.1} parent=63 // pred_check
          %p484 = pneg %p135
        $region78: #{tpu_custom_call.1} parent=63 // pred_check_branch
          %486 = sbr.rel (%p484) target = $region80
        $region79: #{tpu_custom_call.1} parent=63 // pred_region
          %487 = dma.done %s480, 384
        $region80: #{tpu_custom_call.1} parent=63 // pred_fallthru
          _
        %s488 = sand.u32 %s36, 1
        %s489 = scalar_lea.sflag [#allocation10], %s488
        %s490 = sand.u32 %s148, 1
        %s491 = smul.addr %s490, 24
        %s492 = scalar_lea.vmem [#allocation11], %s491
        // Predicated region
        $region81: #{tpu_custom_call.1} parent=63 // pred_check
          %p493 = pneg %p161
        $region82: #{tpu_custom_call.1} parent=63 // pred_check_branch
          %495 = sbr.rel (%p493) target = $region84
        $region83: #{tpu_custom_call.1} parent=63 // pred_region
          %496 = dma.done %s489, 384
        $region84: #{tpu_custom_call.1} parent=63 // pred_fallthru
          _
        %s497 = sand.u32 %s44, 1
        %s498 = scalar_lea.sflag [#allocation4], %s497
        %s499 = sand.u32 %s44, 1
        %s500 = smul.addr %s499, 24
        %s501 = scalar_lea.vmem [#allocation3], %s500
        %p502 = pneg %p57
        %p503 = pneg %p54
        %s504 = sand.u32 %s36, 1
        %s505 = scalar_lea.sflag [#allocation7], %s504
        %s506 = sand.u32 %s70, 1
        %s507 = smul.addr %s506, 24
        %s508 = scalar_lea.vmem [#allocation6], %s507
        %p509 = pneg %p83
        %p510 = pneg %p80
        %s511 = sand.u32 %s36, 1
        %s512 = scalar_lea.sflag [#allocation7], %s511
        %s513 = sand.u32 %s96, 1
        %s514 = smul.addr %s513, 24
        %s515 = scalar_lea.vmem [#allocation8], %s514
        %p516 = pneg %p109
        %p517 = pneg %p106
        %s518 = sand.u32 %s36, 1
        %s519 = scalar_lea.sflag [#allocation10], %s518
        %s520 = sand.u32 %s122, 1
        %s521 = smul.addr %s520, 24
        %s522 = scalar_lea.vmem [#allocation9], %s521
        %p523 = pneg %p135
        %p524 = pneg %p132
        %s525 = sand.u32 %s36, 1
        %s526 = scalar_lea.sflag [#allocation10], %s525
        %s527 = sand.u32 %s148, 1
        %s528 = smul.addr %s527, 24
        %s529 = scalar_lea.vmem [#allocation11], %s528
        %p530 = pneg %p161
        %p531 = pneg %p158
        %p532 = pneg %p182
        %p533 = pneg %p179
        %p534 = pneg %p203
        %p535 = pneg %p200
        %p536 = pneg %p224
        %p537 = pneg %p221
        %p538 = pneg %p245
        %p539 = pneg %p242
        %p540 = pneg %p266
        %p541 = pneg %p263
        %p542 = pneg %p287
        %p543 = pneg %p284
        %p544 = pneg %p313
        %p545 = pneg %p310
        %s546 = sand.u32 %s300, 1
        %s547 = scalar_lea.sflag [#allocation5], %s546
        %s548 = sand.u32 %s300, 1
        %s549 = smul.addr %s548, 24
        %s550 = scalar_lea.vmem [#allocation12], %s549
        %v551 = vld [vmem:[%s492] sm:$0xff]
        %v552 = vld [vmem:[%s492 + $0x8] sm:$0xff]
        %v553 = vld [vmem:[%s492 + $0x10] sm:$0xff]
        %v554 = vmax.f32 %v551, 0.0
        %v555 = vmax.f32 %v552, 0.0
        %v556 = vmax.f32 %v553, 0.0
        %560 = vrot.lane.b32.xlu0 %v554, 127
        %v561 = vpop.permute.xlu0 %560
        %562 = vrot.lane.b32.xlu0 %v555, 127
        %v563 = vpop.permute.xlu0 %562
        %564 = vrot.lane.b32.xlu0 %v556, 127
        %v565 = vpop.permute.xlu0 %564
        %vm566 = vcmask 1039360
        %v567 = vsel %vm566, %v561, %v563
        %v568 = vsel %vm566, %v563, %v565
        %572 = vrot.lane.b32.xlu0 %v554, 126
        %v573 = vpop.permute.xlu0 %572
        %574 = vrot.lane.b32.xlu0 %v555, 126
        %v575 = vpop.permute.xlu0 %574
        %576 = vrot.lane.b32.xlu0 %v556, 126
        %v577 = vpop.permute.xlu0 %576
        %vm578 = vcmask 1031168
        %v579 = vsel %vm578, %v573, %v575
        %v580 = vsel %vm578, %v575, %v577
        %584 = vrot.lane.b32.xlu0 %v554, 110
        %v585 = vpop.permute.xlu0 %584
        %586 = vrot.lane.b32.xlu0 %v555, 110
        %v587 = vpop.permute.xlu0 %586
        %588 = vrot.lane.b32.xlu0 %v556, 110
        %v589 = vpop.permute.xlu0 %588
        %vm590 = vcmask 900096
        %v591 = vsel %vm590, %v585, %v587
        %v592 = vsel %vm590, %v587, %v589
        %596 = vrot.lane.b32.xlu0 %v554, 109
        %v597 = vpop.permute.xlu0 %596
        %598 = vrot.lane.b32.xlu0 %v555, 109
        %v599 = vpop.permute.xlu0 %598
        %600 = vrot.lane.b32.xlu0 %v556, 109
        %v601 = vpop.permute.xlu0 %600
        %vm602 = vcmask 891904
        %v603 = vsel %vm602, %v597, %v599
        %v604 = vsel %vm602, %v599, %v601
        %608 = vrot.lane.b32.xlu0 %v554, 108
        %v609 = vpop.permute.xlu0 %608
        %610 = vrot.lane.b32.xlu0 %v555, 108
        %v611 = vpop.permute.xlu0 %610
        %612 = vrot.lane.b32.xlu0 %v556, 108
        %v613 = vpop.permute.xlu0 %612
        %vm614 = vcmask 883712
        %v615 = vsel %vm614, %v609, %v611
        %v616 = vsel %vm614, %v611, %v613
        %620 = vrot.lane.b32.xlu0 %v554, 92
        %v621 = vpop.permute.xlu0 %620
        %622 = vrot.lane.b32.xlu0 %v555, 92
        %v623 = vpop.permute.xlu0 %622
        %624 = vrot.lane.b32.xlu0 %v556, 92
        %v625 = vpop.permute.xlu0 %624
        %vm626 = vcmask 752640
        %v627 = vsel %vm626, %v621, %v623
        %v628 = vsel %vm626, %v623, %v625
        %632 = vrot.lane.b32.xlu0 %v554, 91
        %v633 = vpop.permute.xlu0 %632
        %634 = vrot.lane.b32.xlu0 %v555, 91
        %v635 = vpop.permute.xlu0 %634
        %636 = vrot.lane.b32.xlu0 %v556, 91
        %v637 = vpop.permute.xlu0 %636
        %vm638 = vcmask 744448
        %v639 = vsel %vm638, %v633, %v635
        %v640 = vsel %vm638, %v635, %v637
        %644 = vrot.lane.b32.xlu0 %v554, 90
        %v645 = vpop.permute.xlu0 %644
        %646 = vrot.lane.b32.xlu0 %v555, 90
        %v647 = vpop.permute.xlu0 %646
        %648 = vrot.lane.b32.xlu0 %v556, 90
        %v649 = vpop.permute.xlu0 %648
        %vm650 = vcmask 736256
        %v651 = vsel %vm650, %v645, %v647
        %v652 = vsel %vm650, %v647, %v649
        %v656 = vld [vmem:[%s7] sm:$0xff]
        %vm657 = vcmask 588800
        %v659 = vsel %vm657, %v656, 0
        %661 = vmatprep.subr.mxu0 0.0
        %662 = vmatpush1.msra.mxu0 0.0
        %663 = vmatprep.subr.mxu0 0.0
        %664 = vmatpush1.msra.mxu0 0.0
        %665 = vmatprep.subr.mxu0 0.0
        %666 = vmatpush1.msra.mxu0 0.0
        %667 = vmatprep.subr.mxu0 0.0
        %668 = vmatpush1.msra.mxu0 0.0
        %669 = vmatprep.subr.mxu0 0.0
        %670 = vmatpush1.msra.mxu0 0.0
        %671 = vmatprep.subr.mxu0 0.0
        %672 = vmatpush1.msra.mxu0 0.0
        %673 = vmatprep.subr.mxu0 0.0
        %674 = vmatpush1.msra.mxu0 0.0
        %675 = vmatprep.subr.mxu0 %v652
        %676 = vmatpush1.msra.mxu0 %v651
        %677 = vmatprep.subr.mxu0 %v640
        %678 = vmatpush1.msra.mxu0 %v639
        %679 = vmatprep.subr.mxu0 %v628
        %680 = vmatpush1.msra.mxu0 %v627
        %681 = vmatprep.subr.mxu0 %v616
        %682 = vmatpush1.msra.mxu0 %v615
        %683 = vmatprep.subr.mxu0 %v604
        %684 = vmatpush1.msra.mxu0 %v603
        %685 = vmatprep.subr.mxu0 %v592
        %686 = vmatpush1.msra.mxu0 %v591
        %687 = vmatprep.subr.mxu0 %v580
        %688 = vmatpush1.msra.mxu0 %v579
        %689 = vmatprep.subr.mxu0 %v568
        %690 = vmatpush1.msra.mxu0 %v567
        %691 = vmatprep.subr.mxu0 %v555
        %692 = vmatpush1.msra.mxu0 %v554
        %693 = vmatprep.subr.mxu0 0.0
        %694 = vmatpush2.msra.mxu0 0.0
        %695 = vmatprep.subr.mxu0 0.0
        %696 = vmatpush2.msra.mxu0 0.0
        %697 = vmatprep.subr.mxu0 0.0
        %698 = vmatpush2.msra.mxu0 0.0
        %699 = vmatprep.subr.mxu0 0.0
        %700 = vmatpush2.msra.mxu0 0.0
        %701 = vmatprep.subr.mxu0 0.0
        %702 = vmatpush2.msra.mxu0 0.0
        %703 = vmatprep.subr.mxu0 0.0
        %704 = vmatpush2.msra.mxu0 0.0
        %705 = vmatprep.subr.mxu0 0.0
        %706 = vmatpush2.msra.mxu0 0.0
        %707 = vmatprep.subr.mxu0 0.0
        %708 = vmatpush2.msra.mxu0 0.0
        %709 = vmatprep.subr.mxu0 0.0
        %710 = vmatpush2.msra.mxu0 0.0
        %711 = vmatprep.subr.mxu0 0.0
        %712 = vmatpush2.msra.mxu0 0.0
        %713 = vmatprep.subr.mxu0 0.0
        %714 = vmatpush2.msra.mxu0 0.0
        %715 = vmatprep.subr.mxu0 0.0
        %716 = vmatpush2.msra.mxu0 0.0
        %717 = vmatprep.subr.mxu0 0.0
        %718 = vmatpush2.msra.mxu0 0.0
        %719 = vmatprep.subr.mxu0 0.0
        %720 = vmatpush2.msra.mxu0 0.0
        %721 = vmatprep.subr.mxu0 0.0
        %722 = vmatpush2.msra.mxu0 0.0
        %723 = vmatprep.subr.mxu0 0.0
        %724 = vmatpush2.msra.mxu0 0.0
        %725 = vmatprep.mubr.f32.mxu0 0.0
        %726 = vmatmul.mubr.f32.gmra.mxu0 %v659
        %v727 = vpop.f32.mrf.mxu0
        %v728 = vadd.f32 0.0, %v727
        %v729 = vpop.f32.mrf.mxu0
        %v730 = vadd.f32 0.0, %v729
        %731 = vdwg.mxu0
        %732 = vmatprep.subr.mxu0 0.0
        %733 = vmatpush1.msra.mxu0 0.0
        %734 = vmatprep.subr.mxu0 0.0
        %735 = vmatpush1.msra.mxu0 0.0
        %736 = vmatprep.subr.mxu0 0.0
        %737 = vmatpush1.msra.mxu0 0.0
        %738 = vmatprep.subr.mxu0 0.0
        %739 = vmatpush1.msra.mxu0 0.0
        %740 = vmatprep.subr.mxu0 0.0
        %741 = vmatpush1.msra.mxu0 0.0
        %742 = vmatprep.subr.mxu0 0.0
        %743 = vmatpush1.msra.mxu0 0.0
        %744 = vmatprep.subr.mxu0 0.0
        %745 = vmatpush1.msra.mxu0 0.0
        %746 = vmatprep.subr.mxu0 0.0
        %747 = vmatpush1.msra.mxu0 %v649
        %748 = vmatprep.subr.mxu0 0.0
        %749 = vmatpush1.msra.mxu0 %v637
        %750 = vmatprep.subr.mxu0 0.0
        %751 = vmatpush1.msra.mxu0 %v625
        %752 = vmatprep.subr.mxu0 0.0
        %753 = vmatpush1.msra.mxu0 %v613
        %754 = vmatprep.subr.mxu0 0.0
        %755 = vmatpush1.msra.mxu0 %v601
        %756 = vmatprep.subr.mxu0 0.0
        %757 = vmatpush1.msra.mxu0 %v589
        %758 = vmatprep.subr.mxu0 0.0
        %759 = vmatpush1.msra.mxu0 %v577
        %760 = vmatprep.subr.mxu0 0.0
        %761 = vmatpush1.msra.mxu0 %v565
        %762 = vmatprep.subr.mxu0 0.0
        %763 = vmatpush1.msra.mxu0 %v556
        %764 = vmatprep.subr.mxu0 0.0
        %765 = vmatpush2.msra.mxu0 0.0
        %766 = vmatprep.subr.mxu0 0.0
        %767 = vmatpush2.msra.mxu0 0.0
        %768 = vmatprep.subr.mxu0 0.0
        %769 = vmatpush2.msra.mxu0 0.0
        %770 = vmatprep.subr.mxu0 0.0
        %771 = vmatpush2.msra.mxu0 0.0
        %772 = vmatprep.subr.mxu0 0.0
        %773 = vmatpush2.msra.mxu0 0.0
        %774 = vmatprep.subr.mxu0 0.0
        %775 = vmatpush2.msra.mxu0 0.0
        %776 = vmatprep.subr.mxu0 0.0
        %777 = vmatpush2.msra.mxu0 0.0
        %778 = vmatprep.subr.mxu0 0.0
        %779 = vmatpush2.msra.mxu0 0.0
        %780 = vmatprep.subr.mxu0 0.0
        %781 = vmatpush2.msra.mxu0 0.0
        %782 = vmatprep.subr.mxu0 0.0
        %783 = vmatpush2.msra.mxu0 0.0
        %784 = vmatprep.subr.mxu0 0.0
        %785 = vmatpush2.msra.mxu0 0.0
        %786 = vmatprep.subr.mxu0 0.0
        %787 = vmatpush2.msra.mxu0 0.0
        %788 = vmatprep.subr.mxu0 0.0
        %789 = vmatpush2.msra.mxu0 0.0
        %790 = vmatprep.subr.mxu0 0.0
        %791 = vmatpush2.msra.mxu0 0.0
        %792 = vmatprep.subr.mxu0 0.0
        %793 = vmatpush2.msra.mxu0 0.0
        %794 = vmatprep.subr.mxu0 0.0
        %795 = vmatpush2.msra.mxu0 0.0
        %796 = vmatprep.mubr.f32.mxu0 0.0
        %797 = vmatmul.mubr.f32.gmra.mxu0 %v659
        %v798 = vpop.f32.mrf.mxu0
        %v799 = vadd.f32 0.0, %v798
        %v800 = vpop.f32.mrf.mxu0
        %801 = vdwg.mxu0
        %v802 = vld [vmem:[%s456] sm:$0xff]
        %v803 = vld [vmem:[%s456 + $0x8] sm:$0xff]
        %v804 = vld [vmem:[%s456 + $0x10] sm:$0xff]
        %v805 = vmax.f32 %v802, 0.0
        %v806 = vmax.f32 %v803, 0.0
        %v807 = vmax.f32 %v804, 0.0
        %v808 = vld [vmem:[%s465] sm:$0xff]
        %v809 = vld [vmem:[%s465 + $0x8] sm:$0xff]
        %v810 = vld [vmem:[%s465 + $0x10] sm:$0xff]
        %v811 = vmax.f32 %v808, 0.0
        %v812 = vmax.f32 %v809, 0.0
        %v813 = vmax.f32 %v810, 0.0
        %v814 = vld [vmem:[%s474] sm:$0xff]
        %v815 = vld [vmem:[%s474 + $0x8] sm:$0xff]
        %v816 = vld [vmem:[%s474 + $0x10] sm:$0xff]
        %v817 = vmax.f32 %v814, 0.0
        %v818 = vmax.f32 %v815, 0.0
        %v819 = vmax.f32 %v816, 0.0
        %v820 = vld [vmem:[%s483] sm:$0xff]
        %v821 = vld [vmem:[%s483 + $0x8] sm:$0xff]
        %v822 = vld [vmem:[%s483 + $0x10] sm:$0xff]
        %v823 = vmax.f32 %v820, 0.0
        %v824 = vmax.f32 %v821, 0.0
        %v825 = vmax.f32 %v822, 0.0
        %v826 = vld [vmem:[%s5] sm:$0xff]
        %830 = vrot.lane.b32.xlu0 %v805, 127
        %v831 = vpop.permute.xlu0 %830
        %832 = vrot.lane.b32.xlu0 %v806, 127
        %v833 = vpop.permute.xlu0 %832
        %834 = vrot.lane.b32.xlu0 %v807, 127
        %v835 = vpop.permute.xlu0 %834
        %v836 = vsel %vm566, %v831, %v833
        %v837 = vsel %vm566, %v833, %v835
        %844 = vrot.lane.b32.xlu0 %v817, 127
        %v845 = vpop.permute.xlu0 %844
        %846 = vrot.lane.b32.xlu0 %v818, 127
        %v847 = vpop.permute.xlu0 %846
        %848 = vrot.lane.b32.xlu0 %v819, 127
        %v849 = vpop.permute.xlu0 %848
        %v850 = vsel %vm566, %v845, %v847
        %v851 = vsel %vm566, %v847, %v849
        %855 = vrot.lane.b32.xlu0 %v805, 110
        %v856 = vpop.permute.xlu0 %855
        %857 = vrot.lane.b32.xlu0 %v806, 110
        %v858 = vpop.permute.xlu0 %857
        %859 = vrot.lane.b32.xlu0 %v807, 110
        %v860 = vpop.permute.xlu0 %859
        %v861 = vsel %vm590, %v856, %v858
        %v862 = vsel %vm590, %v858, %v860
        %869 = vrot.lane.b32.xlu0 %v811, 110
        %v870 = vpop.permute.xlu0 %869
        %871 = vrot.lane.b32.xlu0 %v812, 110
        %v872 = vpop.permute.xlu0 %871
        %873 = vrot.lane.b32.xlu0 %v813, 110
        %v874 = vpop.permute.xlu0 %873
        %v875 = vsel %vm590, %v870, %v872
        %v876 = vsel %vm590, %v872, %v874
        %880 = vrot.lane.b32.xlu0 %v805, 109
        %v881 = vpop.permute.xlu0 %880
        %882 = vrot.lane.b32.xlu0 %v806, 109
        %v883 = vpop.permute.xlu0 %882
        %884 = vrot.lane.b32.xlu0 %v807, 109
        %v885 = vpop.permute.xlu0 %884
        %v886 = vsel %vm602, %v881, %v883
        %v887 = vsel %vm602, %v883, %v885
        %v892 = vsel %vm657, %v826, 0
        %894 = vmatprep.subr.mxu0 0.0
        %895 = vmatpush1.msra.mxu0 0.0
        %896 = vmatprep.subr.mxu0 0.0
        %897 = vmatpush1.msra.mxu0 0.0
        %898 = vmatprep.subr.mxu0 0.0
        %899 = vmatpush1.msra.mxu0 0.0
        %900 = vmatprep.subr.mxu0 0.0
        %901 = vmatpush1.msra.mxu0 0.0
        %902 = vmatprep.subr.mxu0 0.0
        %903 = vmatpush1.msra.mxu0 0.0
        %904 = vmatprep.subr.mxu0 0.0
        %905 = vmatpush1.msra.mxu0 0.0
        %906 = vmatprep.subr.mxu0 0.0
        %907 = vmatpush1.msra.mxu0 0.0
        %908 = vmatprep.subr.mxu0 %v887
        %909 = vmatpush1.msra.mxu0 %v886
        %910 = vmatprep.subr.mxu0 %v876
        %911 = vmatpush1.msra.mxu0 %v875
        %912 = vmatprep.subr.mxu0 %v862
        %913 = vmatpush1.msra.mxu0 %v861
        %914 = vmatprep.subr.mxu0 %v851
        %915 = vmatpush1.msra.mxu0 %v850
        %916 = vmatprep.subr.mxu0 %v824
        %917 = vmatpush1.msra.mxu0 %v823
        %918 = vmatprep.subr.mxu0 %v818
        %919 = vmatpush1.msra.mxu0 %v817
        %920 = vmatprep.subr.mxu0 %v837
        %921 = vmatpush1.msra.mxu0 %v836
        %922 = vmatprep.subr.mxu0 %v812
        %923 = vmatpush1.msra.mxu0 %v811
        %924 = vmatprep.subr.mxu0 %v806
        %925 = vmatpush1.msra.mxu0 %v805
        %926 = vmatprep.subr.mxu0 0.0
        %927 = vmatpush2.msra.mxu0 0.0
        %928 = vmatprep.subr.mxu0 0.0
        %929 = vmatpush2.msra.mxu0 0.0
        %930 = vmatprep.subr.mxu0 0.0
        %931 = vmatpush2.msra.mxu0 0.0
        %932 = vmatprep.subr.mxu0 0.0
        %933 = vmatpush2.msra.mxu0 0.0
        %934 = vmatprep.subr.mxu0 0.0
        %935 = vmatpush2.msra.mxu0 0.0
        %936 = vmatprep.subr.mxu0 0.0
        %937 = vmatpush2.msra.mxu0 0.0
        %938 = vmatprep.subr.mxu0 0.0
        %939 = vmatpush2.msra.mxu0 0.0
        %940 = vmatprep.subr.mxu0 0.0
        %941 = vmatpush2.msra.mxu0 0.0
        %942 = vmatprep.subr.mxu0 0.0
        %943 = vmatpush2.msra.mxu0 0.0
        %944 = vmatprep.subr.mxu0 0.0
        %945 = vmatpush2.msra.mxu0 0.0
        %946 = vmatprep.subr.mxu0 0.0
        %947 = vmatpush2.msra.mxu0 0.0
        %948 = vmatprep.subr.mxu0 0.0
        %949 = vmatpush2.msra.mxu0 0.0
        %950 = vmatprep.subr.mxu0 0.0
        %951 = vmatpush2.msra.mxu0 0.0
        %952 = vmatprep.subr.mxu0 0.0
        %953 = vmatpush2.msra.mxu0 0.0
        %954 = vmatprep.subr.mxu0 0.0
        %955 = vmatpush2.msra.mxu0 0.0
        %956 = vmatprep.subr.mxu0 0.0
        %957 = vmatpush2.msra.mxu0 0.0
        %958 = vmatprep.mubr.f32.mxu0 0.0
        %959 = vmatmul.mubr.f32.gmra.mxu0 %v892
        %v960 = vpop.f32.mrf.mxu0
        %v961 = vadd.f32 0.0, %v960
        %v962 = vpop.f32.mrf.mxu0
        %v963 = vadd.f32 0.0, %v962
        %964 = vdwg.mxu0
        %965 = vmatprep.subr.mxu0 0.0
        %966 = vmatpush1.msra.mxu0 0.0
        %967 = vmatprep.subr.mxu0 0.0
        %968 = vmatpush1.msra.mxu0 0.0
        %969 = vmatprep.subr.mxu0 0.0
        %970 = vmatpush1.msra.mxu0 0.0
        %971 = vmatprep.subr.mxu0 0.0
        %972 = vmatpush1.msra.mxu0 0.0
        %973 = vmatprep.subr.mxu0 0.0
        %974 = vmatpush1.msra.mxu0 0.0
        %975 = vmatprep.subr.mxu0 0.0
        %976 = vmatpush1.msra.mxu0 0.0
        %977 = vmatprep.subr.mxu0 0.0
        %978 = vmatpush1.msra.mxu0 0.0
        %979 = vmatprep.subr.mxu0 0.0
        %980 = vmatpush1.msra.mxu0 %v885
        %981 = vmatprep.subr.mxu0 0.0
        %982 = vmatpush1.msra.mxu0 %v874
        %983 = vmatprep.subr.mxu0 0.0
        %984 = vmatpush1.msra.mxu0 %v860
        %985 = vmatprep.subr.mxu0 0.0
        %986 = vmatpush1.msra.mxu0 %v849
        %987 = vmatprep.subr.mxu0 0.0
        %988 = vmatpush1.msra.mxu0 %v825
        %989 = vmatprep.subr.mxu0 0.0
        %990 = vmatpush1.msra.mxu0 %v819
        %991 = vmatprep.subr.mxu0 0.0
        %992 = vmatpush1.msra.mxu0 %v835
        %993 = vmatprep.subr.mxu0 0.0
        %994 = vmatpush1.msra.mxu0 %v813
        %995 = vmatprep.subr.mxu0 0.0
        %996 = vmatpush1.msra.mxu0 %v807
        %997 = vmatprep.subr.mxu0 0.0
        %998 = vmatpush2.msra.mxu0 0.0
        %999 = vmatprep.subr.mxu0 0.0
        %1000 = vmatpush2.msra.mxu0 0.0
        %1001 = vmatprep.subr.mxu0 0.0
        %1002 = vmatpush2.msra.mxu0 0.0
        %1003 = vmatprep.subr.mxu0 0.0
        %1004 = vmatpush2.msra.mxu0 0.0
        %1005 = vmatprep.subr.mxu0 0.0
        %1006 = vmatpush2.msra.mxu0 0.0
        %1007 = vmatprep.subr.mxu0 0.0
        %1008 = vmatpush2.msra.mxu0 0.0
        %1009 = vmatprep.subr.mxu0 0.0
        %1010 = vmatpush2.msra.mxu0 0.0
        %1011 = vmatprep.subr.mxu0 0.0
        %1012 = vmatpush2.msra.mxu0 0.0
        %1013 = vmatprep.subr.mxu0 0.0
        %1014 = vmatpush2.msra.mxu0 0.0
        %1015 = vmatprep.subr.mxu0 0.0
        %1016 = vmatpush2.msra.mxu0 0.0
        %1017 = vmatprep.subr.mxu0 0.0
        %1018 = vmatpush2.msra.mxu0 0.0
        %1019 = vmatprep.subr.mxu0 0.0
        %1020 = vmatpush2.msra.mxu0 0.0
        %1021 = vmatprep.subr.mxu0 0.0
        %1022 = vmatpush2.msra.mxu0 0.0
        %1023 = vmatprep.subr.mxu0 0.0
        %1024 = vmatpush2.msra.mxu0 0.0
        %1025 = vmatprep.subr.mxu0 0.0
        %1026 = vmatpush2.msra.mxu0 0.0
        %1027 = vmatprep.subr.mxu0 0.0
        %1028 = vmatpush2.msra.mxu0 0.0
        %1029 = vmatprep.mubr.f32.mxu0 0.0
        %1030 = vmatmul.mubr.f32.gmra.mxu0 %v892
        %v1031 = vpop.f32.mrf.mxu0
        %v1032 = vadd.f32 0.0, %v1031
        %v1033 = vpop.f32.mrf.mxu0
        %1034 = vdwg.mxu0
        %1035 = vrot.lane.b32.xlu0 %v811, 127
        %v1036 = vpop.permute.xlu0 %1035
        %1037 = vrot.lane.b32.xlu0 %v812, 127
        %v1038 = vpop.permute.xlu0 %1037
        %1039 = vrot.lane.b32.xlu0 %v813, 127
        %v1040 = vpop.permute.xlu0 %1039
        %v1041 = vsel %vm566, %v1036, %v1038
        %v1042 = vsel %vm566, %v1038, %v1040
        %1049 = vrot.lane.b32.xlu0 %v823, 127
        %v1050 = vpop.permute.xlu0 %1049
        %1051 = vrot.lane.b32.xlu0 %v824, 127
        %v1052 = vpop.permute.xlu0 %1051
        %1053 = vrot.lane.b32.xlu0 %v825, 127
        %v1054 = vpop.permute.xlu0 %1053
        %v1055 = vsel %vm566, %v1050, %v1052
        %v1056 = vsel %vm566, %v1052, %v1054
        %1060 = vrot.lane.b32.xlu0 %v811, 109
        %v1061 = vpop.permute.xlu0 %1060
        %1062 = vrot.lane.b32.xlu0 %v812, 109
        %v1063 = vpop.permute.xlu0 %1062
        %1064 = vrot.lane.b32.xlu0 %v813, 109
        %v1065 = vpop.permute.xlu0 %1064
        %v1066 = vsel %vm602, %v1061, %v1063
        %v1067 = vsel %vm602, %v1063, %v1065
        %1071 = vmatprep.subr.mxu0 0.0
        %1072 = vmatpush1.msra.mxu0 0.0
        %1073 = vmatprep.subr.mxu0 0.0
        %1074 = vmatpush1.msra.mxu0 0.0
        %1075 = vmatprep.subr.mxu0 0.0
        %1076 = vmatpush1.msra.mxu0 0.0
        %1077 = vmatprep.subr.mxu0 0.0
        %1078 = vmatpush1.msra.mxu0 0.0
        %1079 = vmatprep.subr.mxu0 0.0
        %1080 = vmatpush1.msra.mxu0 0.0
        %1081 = vmatprep.subr.mxu0 0.0
        %1082 = vmatpush1.msra.mxu0 0.0
        %1083 = vmatprep.subr.mxu0 0.0
        %1084 = vmatpush1.msra.mxu0 0.0
        %1085 = vmatprep.subr.mxu0 %v1067
        %1086 = vmatpush1.msra.mxu0 %v1066
        %1087 = vmatprep.subr.mxu0 %v887
        %1088 = vmatpush1.msra.mxu0 %v886
        %1089 = vmatprep.subr.mxu0 %v876
        %1090 = vmatpush1.msra.mxu0 %v875
        %1091 = vmatprep.subr.mxu0 %v1056
        %1092 = vmatpush1.msra.mxu0 %v1055
        %1093 = vmatprep.subr.mxu0 %v851
        %1094 = vmatpush1.msra.mxu0 %v850
        %1095 = vmatprep.subr.mxu0 %v824
        %1096 = vmatpush1.msra.mxu0 %v823
        %1097 = vmatprep.subr.mxu0 %v1042
        %1098 = vmatpush1.msra.mxu0 %v1041
        %1099 = vmatprep.subr.mxu0 %v837
        %1100 = vmatpush1.msra.mxu0 %v836
        %1101 = vmatprep.subr.mxu0 %v812
        %1102 = vmatpush1.msra.mxu0 %v811
        %1103 = vmatprep.subr.mxu0 0.0
        %1104 = vmatpush2.msra.mxu0 0.0
        %1105 = vmatprep.subr.mxu0 0.0
        %1106 = vmatpush2.msra.mxu0 0.0
        %1107 = vmatprep.subr.mxu0 0.0
        %1108 = vmatpush2.msra.mxu0 0.0
        %1109 = vmatprep.subr.mxu0 0.0
        %1110 = vmatpush2.msra.mxu0 0.0
        %1111 = vmatprep.subr.mxu0 0.0
        %1112 = vmatpush2.msra.mxu0 0.0
        %1113 = vmatprep.subr.mxu0 0.0
        %1114 = vmatpush2.msra.mxu0 0.0
        %1115 = vmatprep.subr.mxu0 0.0
        %1116 = vmatpush2.msra.mxu0 0.0
        %1117 = vmatprep.subr.mxu0 0.0
        %1118 = vmatpush2.msra.mxu0 0.0
        %1119 = vmatprep.subr.mxu0 0.0
        %1120 = vmatpush2.msra.mxu0 0.0
        %1121 = vmatprep.subr.mxu0 0.0
        %1122 = vmatpush2.msra.mxu0 0.0
        %1123 = vmatprep.subr.mxu0 0.0
        %1124 = vmatpush2.msra.mxu0 0.0
        %1125 = vmatprep.subr.mxu0 0.0
        %1126 = vmatpush2.msra.mxu0 0.0
        %1127 = vmatprep.subr.mxu0 0.0
        %1128 = vmatpush2.msra.mxu0 0.0
        %1129 = vmatprep.subr.mxu0 0.0
        %1130 = vmatpush2.msra.mxu0 0.0
        %1131 = vmatprep.subr.mxu0 0.0
        %1132 = vmatpush2.msra.mxu0 0.0
        %1133 = vmatprep.subr.mxu0 0.0
        %1134 = vmatpush2.msra.mxu0 0.0
        %1135 = vmatprep.mubr.f32.mxu0 0.0
        %1136 = vmatmul.mubr.f32.gmra.mxu0 %v892
        %v1137 = vpop.f32.mrf.mxu0
        %v1138 = vadd.f32 0.0, %v1137
        %v1139 = vpop.f32.mrf.mxu0
        %v1140 = vadd.f32 0.0, %v1139
        %1141 = vdwg.mxu0
        %1142 = vmatprep.subr.mxu0 0.0
        %1143 = vmatpush1.msra.mxu0 0.0
        %1144 = vmatprep.subr.mxu0 0.0
        %1145 = vmatpush1.msra.mxu0 0.0
        %1146 = vmatprep.subr.mxu0 0.0
        %1147 = vmatpush1.msra.mxu0 0.0
        %1148 = vmatprep.subr.mxu0 0.0
        %1149 = vmatpush1.msra.mxu0 0.0
        %1150 = vmatprep.subr.mxu0 0.0
        %1151 = vmatpush1.msra.mxu0 0.0
        %1152 = vmatprep.subr.mxu0 0.0
        %1153 = vmatpush1.msra.mxu0 0.0
        %1154 = vmatprep.subr.mxu0 0.0
        %1155 = vmatpush1.msra.mxu0 0.0
        %1156 = vmatprep.subr.mxu0 0.0
        %1157 = vmatpush1.msra.mxu0 %v1065
        %1158 = vmatprep.subr.mxu0 0.0
        %1159 = vmatpush1.msra.mxu0 %v885
        %1160 = vmatprep.subr.mxu0 0.0
        %1161 = vmatpush1.msra.mxu0 %v874
        %1162 = vmatprep.subr.mxu0 0.0
        %1163 = vmatpush1.msra.mxu0 %v1054
        %1164 = vmatprep.subr.mxu0 0.0
        %1165 = vmatpush1.msra.mxu0 %v849
        %1166 = vmatprep.subr.mxu0 0.0
        %1167 = vmatpush1.msra.mxu0 %v825
        %1168 = vmatprep.subr.mxu0 0.0
        %1169 = vmatpush1.msra.mxu0 %v1040
        %1170 = vmatprep.subr.mxu0 0.0
        %1171 = vmatpush1.msra.mxu0 %v835
        %1172 = vmatprep.subr.mxu0 0.0
        %1173 = vmatpush1.msra.mxu0 %v813
        %1174 = vmatprep.subr.mxu0 0.0
        %1175 = vmatpush2.msra.mxu0 0.0
        %1176 = vmatprep.subr.mxu0 0.0
        %1177 = vmatpush2.msra.mxu0 0.0
        %1178 = vmatprep.subr.mxu0 0.0
        %1179 = vmatpush2.msra.mxu0 0.0
        %1180 = vmatprep.subr.mxu0 0.0
        %1181 = vmatpush2.msra.mxu0 0.0
        %1182 = vmatprep.subr.mxu0 0.0
        %1183 = vmatpush2.msra.mxu0 0.0
        %1184 = vmatprep.subr.mxu0 0.0
        %1185 = vmatpush2.msra.mxu0 0.0
        %1186 = vmatprep.subr.mxu0 0.0
        %1187 = vmatpush2.msra.mxu0 0.0
        %1188 = vmatprep.subr.mxu0 0.0
        %1189 = vmatpush2.msra.mxu0 0.0
        %1190 = vmatprep.subr.mxu0 0.0
        %1191 = vmatpush2.msra.mxu0 0.0
        %1192 = vmatprep.subr.mxu0 0.0
        %1193 = vmatpush2.msra.mxu0 0.0
        %1194 = vmatprep.subr.mxu0 0.0
        %1195 = vmatpush2.msra.mxu0 0.0
        %1196 = vmatprep.subr.mxu0 0.0
        %1197 = vmatpush2.msra.mxu0 0.0
        %1198 = vmatprep.subr.mxu0 0.0
        %1199 = vmatpush2.msra.mxu0 0.0
        %1200 = vmatprep.subr.mxu0 0.0
        %1201 = vmatpush2.msra.mxu0 0.0
        %1202 = vmatprep.subr.mxu0 0.0
        %1203 = vmatpush2.msra.mxu0 0.0
        %1204 = vmatprep.subr.mxu0 0.0
        %1205 = vmatpush2.msra.mxu0 0.0
        %1206 = vmatprep.mubr.f32.mxu0 0.0
        %1207 = vmatmul.mubr.f32.gmra.mxu0 %v892
        %v1208 = vpop.f32.mrf.mxu0
        %v1209 = vadd.f32 0.0, %v1208
        %v1210 = vpop.f32.mrf.mxu0
        %1211 = vdwg.mxu0
        %v1212 = vmax.f32 %v961, %v1138
        %v1213 = vmax.f32 %v963, %v1140
        %v1214 = vmax.f32 %v1032, %v1209
        %1215 = vrot.lane.b32.xlu0 %v817, 110
        %v1216 = vpop.permute.xlu0 %1215
        %1217 = vrot.lane.b32.xlu0 %v818, 110
        %v1218 = vpop.permute.xlu0 %1217
        %1219 = vrot.lane.b32.xlu0 %v819, 110
        %v1220 = vpop.permute.xlu0 %1219
        %v1221 = vsel %vm590, %v1216, %v1218
        %v1222 = vsel %vm590, %v1218, %v1220
        %1226 = vrot.lane.b32.xlu0 %v823, 110
        %v1227 = vpop.permute.xlu0 %1226
        %1228 = vrot.lane.b32.xlu0 %v824, 110
        %v1229 = vpop.permute.xlu0 %1228
        %1230 = vrot.lane.b32.xlu0 %v825, 110
        %v1231 = vpop.permute.xlu0 %1230
        %v1232 = vsel %vm590, %v1227, %v1229
        %v1233 = vsel %vm590, %v1229, %v1231
        %1237 = vrot.lane.b32.xlu0 %v817, 109
        %v1238 = vpop.permute.xlu0 %1237
        %1239 = vrot.lane.b32.xlu0 %v818, 109
        %v1240 = vpop.permute.xlu0 %1239
        %1241 = vrot.lane.b32.xlu0 %v819, 109
        %v1242 = vpop.permute.xlu0 %1241
        %v1243 = vsel %vm602, %v1238, %v1240
        %v1244 = vsel %vm602, %v1240, %v1242
        %1248 = vmatprep.subr.mxu0 0.0
        %1249 = vmatpush1.msra.mxu0 0.0
        %1250 = vmatprep.subr.mxu0 0.0
        %1251 = vmatpush1.msra.mxu0 0.0
        %1252 = vmatprep.subr.mxu0 0.0
        %1253 = vmatpush1.msra.mxu0 0.0
        %1254 = vmatprep.subr.mxu0 0.0
        %1255 = vmatpush1.msra.mxu0 0.0
        %1256 = vmatprep.subr.mxu0 0.0
        %1257 = vmatpush1.msra.mxu0 0.0
        %1258 = vmatprep.subr.mxu0 0.0
        %1259 = vmatpush1.msra.mxu0 0.0
        %1260 = vmatprep.subr.mxu0 0.0
        %1261 = vmatpush1.msra.mxu0 0.0
        %1262 = vmatprep.subr.mxu0 %v1244
        %1263 = vmatpush1.msra.mxu0 %v1243
        %1264 = vmatprep.subr.mxu0 %v1233
        %1265 = vmatpush1.msra.mxu0 %v1232
        %1266 = vmatprep.subr.mxu0 %v1222
        %1267 = vmatpush1.msra.mxu0 %v1221
        %1268 = vmatprep.subr.mxu0 %v887
        %1269 = vmatpush1.msra.mxu0 %v886
        %1270 = vmatprep.subr.mxu0 %v876
        %1271 = vmatpush1.msra.mxu0 %v875
        %1272 = vmatprep.subr.mxu0 %v862
        %1273 = vmatpush1.msra.mxu0 %v861
        %1274 = vmatprep.subr.mxu0 %v851
        %1275 = vmatpush1.msra.mxu0 %v850
        %1276 = vmatprep.subr.mxu0 %v824
        %1277 = vmatpush1.msra.mxu0 %v823
        %1278 = vmatprep.subr.mxu0 %v818
        %1279 = vmatpush1.msra.mxu0 %v817
        %1280 = vmatprep.subr.mxu0 0.0
        %1281 = vmatpush2.msra.mxu0 0.0
        %1282 = vmatprep.subr.mxu0 0.0
        %1283 = vmatpush2.msra.mxu0 0.0
        %1284 = vmatprep.subr.mxu0 0.0
        %1285 = vmatpush2.msra.mxu0 0.0
        %1286 = vmatprep.subr.mxu0 0.0
        %1287 = vmatpush2.msra.mxu0 0.0
        %1288 = vmatprep.subr.mxu0 0.0
        %1289 = vmatpush2.msra.mxu0 0.0
        %1290 = vmatprep.subr.mxu0 0.0
        %1291 = vmatpush2.msra.mxu0 0.0
        %1292 = vmatprep.subr.mxu0 0.0
        %1293 = vmatpush2.msra.mxu0 0.0
        %1294 = vmatprep.subr.mxu0 0.0
        %1295 = vmatpush2.msra.mxu0 0.0
        %1296 = vmatprep.subr.mxu0 0.0
        %1297 = vmatpush2.msra.mxu0 0.0
        %1298 = vmatprep.subr.mxu0 0.0
        %1299 = vmatpush2.msra.mxu0 0.0
        %1300 = vmatprep.subr.mxu0 0.0
        %1301 = vmatpush2.msra.mxu0 0.0
        %1302 = vmatprep.subr.mxu0 0.0
        %1303 = vmatpush2.msra.mxu0 0.0
        %1304 = vmatprep.subr.mxu0 0.0
        %1305 = vmatpush2.msra.mxu0 0.0
        %1306 = vmatprep.subr.mxu0 0.0
        %1307 = vmatpush2.msra.mxu0 0.0
        %1308 = vmatprep.subr.mxu0 0.0
        %1309 = vmatpush2.msra.mxu0 0.0
        %1310 = vmatprep.subr.mxu0 0.0
        %1311 = vmatpush2.msra.mxu0 0.0
        %1312 = vmatprep.mubr.f32.mxu0 0.0
        %1313 = vmatmul.mubr.f32.gmra.mxu0 %v892
        %v1314 = vpop.f32.mrf.mxu0
        %v1315 = vadd.f32 0.0, %v1314
        %v1316 = vpop.f32.mrf.mxu0
        %v1317 = vadd.f32 0.0, %v1316
        %1318 = vdwg.mxu0
        %1319 = vmatprep.subr.mxu0 0.0
        %1320 = vmatpush1.msra.mxu0 0.0
        %1321 = vmatprep.subr.mxu0 0.0
        %1322 = vmatpush1.msra.mxu0 0.0
        %1323 = vmatprep.subr.mxu0 0.0
        %1324 = vmatpush1.msra.mxu0 0.0
        %1325 = vmatprep.subr.mxu0 0.0
        %1326 = vmatpush1.msra.mxu0 0.0
        %1327 = vmatprep.subr.mxu0 0.0
        %1328 = vmatpush1.msra.mxu0 0.0
        %1329 = vmatprep.subr.mxu0 0.0
        %1330 = vmatpush1.msra.mxu0 0.0
        %1331 = vmatprep.subr.mxu0 0.0
        %1332 = vmatpush1.msra.mxu0 0.0
        %1333 = vmatprep.subr.mxu0 0.0
        %1334 = vmatpush1.msra.mxu0 %v1242
        %1335 = vmatprep.subr.mxu0 0.0
        %1336 = vmatpush1.msra.mxu0 %v1231
        %1337 = vmatprep.subr.mxu0 0.0
        %1338 = vmatpush1.msra.mxu0 %v1220
        %1339 = vmatprep.subr.mxu0 0.0
        %1340 = vmatpush1.msra.mxu0 %v885
        %1341 = vmatprep.subr.mxu0 0.0
        %1342 = vmatpush1.msra.mxu0 %v874
        %1343 = vmatprep.subr.mxu0 0.0
        %1344 = vmatpush1.msra.mxu0 %v860
        %1345 = vmatprep.subr.mxu0 0.0
        %1346 = vmatpush1.msra.mxu0 %v849
        %1347 = vmatprep.subr.mxu0 0.0
        %1348 = vmatpush1.msra.mxu0 %v825
        %1349 = vmatprep.subr.mxu0 0.0
        %1350 = vmatpush1.msra.mxu0 %v819
        %1351 = vmatprep.subr.mxu0 0.0
        %1352 = vmatpush2.msra.mxu0 0.0
        %1353 = vmatprep.subr.mxu0 0.0
        %1354 = vmatpush2.msra.mxu0 0.0
        %1355 = vmatprep.subr.mxu0 0.0
        %1356 = vmatpush2.msra.mxu0 0.0
        %1357 = vmatprep.subr.mxu0 0.0
        %1358 = vmatpush2.msra.mxu0 0.0
        %1359 = vmatprep.subr.mxu0 0.0
        %1360 = vmatpush2.msra.mxu0 0.0
        %1361 = vmatprep.subr.mxu0 0.0
        %1362 = vmatpush2.msra.mxu0 0.0
        %1363 = vmatprep.subr.mxu0 0.0
        %1364 = vmatpush2.msra.mxu0 0.0
        %1365 = vmatprep.subr.mxu0 0.0
        %1366 = vmatpush2.msra.mxu0 0.0
        %1367 = vmatprep.subr.mxu0 0.0
        %1368 = vmatpush2.msra.mxu0 0.0
        %1369 = vmatprep.subr.mxu0 0.0
        %1370 = vmatpush2.msra.mxu0 0.0
        %1371 = vmatprep.subr.mxu0 0.0
        %1372 = vmatpush2.msra.mxu0 0.0
        %1373 = vmatprep.subr.mxu0 0.0
        %1374 = vmatpush2.msra.mxu0 0.0
        %1375 = vmatprep.subr.mxu0 0.0
        %1376 = vmatpush2.msra.mxu0 0.0
        %1377 = vmatprep.subr.mxu0 0.0
        %1378 = vmatpush2.msra.mxu0 0.0
        %1379 = vmatprep.subr.mxu0 0.0
        %1380 = vmatpush2.msra.mxu0 0.0
        %1381 = vmatprep.subr.mxu0 0.0
        %1382 = vmatpush2.msra.mxu0 0.0
        %1383 = vmatprep.mubr.f32.mxu0 0.0
        %1384 = vmatmul.mubr.f32.gmra.mxu0 %v892
        %v1385 = vpop.f32.mrf.mxu0
        %v1386 = vadd.f32 0.0, %v1385
        %v1387 = vpop.f32.mrf.mxu0
        %1388 = vdwg.mxu0
        %v1389 = vmax.f32 %v1212, %v1315
        %v1390 = vmax.f32 %v1213, %v1317
        %v1391 = vmax.f32 %v1214, %v1386
        %1392 = vrot.lane.b32.xlu0 %v823, 109
        %v1393 = vpop.permute.xlu0 %1392
        %1394 = vrot.lane.b32.xlu0 %v824, 109
        %v1395 = vpop.permute.xlu0 %1394
        %1396 = vrot.lane.b32.xlu0 %v825, 109
        %v1397 = vpop.permute.xlu0 %1396
        %v1398 = vsel %vm602, %v1393, %v1395
        %v1399 = vsel %vm602, %v1395, %v1397
        %1403 = vmatprep.subr.mxu0 0.0
        %1404 = vmatpush1.msra.mxu0 0.0
        %1405 = vmatprep.subr.mxu0 0.0
        %1406 = vmatpush1.msra.mxu0 0.0
        %1407 = vmatprep.subr.mxu0 0.0
        %1408 = vmatpush1.msra.mxu0 0.0
        %1409 = vmatprep.subr.mxu0 0.0
        %1410 = vmatpush1.msra.mxu0 0.0
        %1411 = vmatprep.subr.mxu0 0.0
        %1412 = vmatpush1.msra.mxu0 0.0
        %1413 = vmatprep.subr.mxu0 0.0
        %1414 = vmatpush1.msra.mxu0 0.0
        %1415 = vmatprep.subr.mxu0 0.0
        %1416 = vmatpush1.msra.mxu0 0.0
        %1417 = vmatprep.subr.mxu0 %v1399
        %1418 = vmatpush1.msra.mxu0 %v1398
        %1419 = vmatprep.subr.mxu0 %v1244
        %1420 = vmatpush1.msra.mxu0 %v1243
        %1421 = vmatprep.subr.mxu0 %v1233
        %1422 = vmatpush1.msra.mxu0 %v1232
        %1423 = vmatprep.subr.mxu0 %v1067
        %1424 = vmatpush1.msra.mxu0 %v1066
        %1425 = vmatprep.subr.mxu0 %v887
        %1426 = vmatpush1.msra.mxu0 %v886
        %1427 = vmatprep.subr.mxu0 %v876
        %1428 = vmatpush1.msra.mxu0 %v875
        %1429 = vmatprep.subr.mxu0 %v1056
        %1430 = vmatpush1.msra.mxu0 %v1055
        %1431 = vmatprep.subr.mxu0 %v851
        %1432 = vmatpush1.msra.mxu0 %v850
        %1433 = vmatprep.subr.mxu0 %v824
        %1434 = vmatpush1.msra.mxu0 %v823
        %1435 = vmatprep.subr.mxu0 0.0
        %1436 = vmatpush2.msra.mxu0 0.0
        %1437 = vmatprep.subr.mxu0 0.0
        %1438 = vmatpush2.msra.mxu0 0.0
        %1439 = vmatprep.subr.mxu0 0.0
        %1440 = vmatpush2.msra.mxu0 0.0
        %1441 = vmatprep.subr.mxu0 0.0
        %1442 = vmatpush2.msra.mxu0 0.0
        %1443 = vmatprep.subr.mxu0 0.0
        %1444 = vmatpush2.msra.mxu0 0.0
        %1445 = vmatprep.subr.mxu0 0.0
        %1446 = vmatpush2.msra.mxu0 0.0
        %1447 = vmatprep.subr.mxu0 0.0
        %1448 = vmatpush2.msra.mxu0 0.0
        %1449 = vmatprep.subr.mxu0 0.0
        %1450 = vmatpush2.msra.mxu0 0.0
        %1451 = vmatprep.subr.mxu0 0.0
        %1452 = vmatpush2.msra.mxu0 0.0
        %1453 = vmatprep.subr.mxu0 0.0
        %1454 = vmatpush2.msra.mxu0 0.0
        %1455 = vmatprep.subr.mxu0 0.0
        %1456 = vmatpush2.msra.mxu0 0.0
        %1457 = vmatprep.subr.mxu0 0.0
        %1458 = vmatpush2.msra.mxu0 0.0
        %1459 = vmatprep.subr.mxu0 0.0
        %1460 = vmatpush2.msra.mxu0 0.0
        %1461 = vmatprep.subr.mxu0 0.0
        %1462 = vmatpush2.msra.mxu0 0.0
        %1463 = vmatprep.subr.mxu0 0.0
        %1464 = vmatpush2.msra.mxu0 0.0
        %1465 = vmatprep.subr.mxu0 0.0
        %1466 = vmatpush2.msra.mxu0 0.0
        %1467 = vmatprep.mubr.f32.mxu0 0.0
        %1468 = vmatmul.mubr.f32.gmra.mxu0 %v892
        %v1469 = vpop.f32.mrf.mxu0
        %v1470 = vadd.f32 0.0, %v1469
        %v1471 = vpop.f32.mrf.mxu0
        %v1472 = vadd.f32 0.0, %v1471
        %1473 = vdwg.mxu0
        %1474 = vmatprep.subr.mxu0 0.0
        %1475 = vmatpush1.msra.mxu0 0.0
        %1476 = vmatprep.subr.mxu0 0.0
        %1477 = vmatpush1.msra.mxu0 0.0
        %1478 = vmatprep.subr.mxu0 0.0
        %1479 = vmatpush1.msra.mxu0 0.0
        %1480 = vmatprep.subr.mxu0 0.0
        %1481 = vmatpush1.msra.mxu0 0.0
        %1482 = vmatprep.subr.mxu0 0.0
        %1483 = vmatpush1.msra.mxu0 0.0
        %1484 = vmatprep.subr.mxu0 0.0
        %1485 = vmatpush1.msra.mxu0 0.0
        %1486 = vmatprep.subr.mxu0 0.0
        %1487 = vmatpush1.msra.mxu0 0.0
        %1488 = vmatprep.subr.mxu0 0.0
        %1489 = vmatpush1.msra.mxu0 %v1397
        %1490 = vmatprep.subr.mxu0 0.0
        %1491 = vmatpush1.msra.mxu0 %v1242
        %1492 = vmatprep.subr.mxu0 0.0
        %1493 = vmatpush1.msra.mxu0 %v1231
        %1494 = vmatprep.subr.mxu0 0.0
        %1495 = vmatpush1.msra.mxu0 %v1065
        %1496 = vmatprep.subr.mxu0 0.0
        %1497 = vmatpush1.msra.mxu0 %v885
        %1498 = vmatprep.subr.mxu0 0.0
        %1499 = vmatpush1.msra.mxu0 %v874
        %1500 = vmatprep.subr.mxu0 0.0
        %1501 = vmatpush1.msra.mxu0 %v1054
        %1502 = vmatprep.subr.mxu0 0.0
        %1503 = vmatpush1.msra.mxu0 %v849
        %1504 = vmatprep.subr.mxu0 0.0
        %1505 = vmatpush1.msra.mxu0 %v825
        %1506 = vmatprep.subr.mxu0 0.0
        %1507 = vmatpush2.msra.mxu0 0.0
        %1508 = vmatprep.subr.mxu0 0.0
        %1509 = vmatpush2.msra.mxu0 0.0
        %1510 = vmatprep.subr.mxu0 0.0
        %1511 = vmatpush2.msra.mxu0 0.0
        %1512 = vmatprep.subr.mxu0 0.0
        %1513 = vmatpush2.msra.mxu0 0.0
        %1514 = vmatprep.subr.mxu0 0.0
        %1515 = vmatpush2.msra.mxu0 0.0
        %1516 = vmatprep.subr.mxu0 0.0
        %1517 = vmatpush2.msra.mxu0 0.0
        %1518 = vmatprep.subr.mxu0 0.0
        %1519 = vmatpush2.msra.mxu0 0.0
        %1520 = vmatprep.subr.mxu0 0.0
        %1521 = vmatpush2.msra.mxu0 0.0
        %1522 = vmatprep.subr.mxu0 0.0
        %1523 = vmatpush2.msra.mxu0 0.0
        %1524 = vmatprep.subr.mxu0 0.0
        %1525 = vmatpush2.msra.mxu0 0.0
        %1526 = vmatprep.subr.mxu0 0.0
        %1527 = vmatpush2.msra.mxu0 0.0
        %1528 = vmatprep.subr.mxu0 0.0
        %1529 = vmatpush2.msra.mxu0 0.0
        %1530 = vmatprep.subr.mxu0 0.0
        %1531 = vmatpush2.msra.mxu0 0.0
        %1532 = vmatprep.subr.mxu0 0.0
        %1533 = vmatpush2.msra.mxu0 0.0
        %1534 = vmatprep.subr.mxu0 0.0
        %1535 = vmatpush2.msra.mxu0 0.0
        %1536 = vmatprep.subr.mxu0 0.0
        %1537 = vmatpush2.msra.mxu0 0.0
        %1538 = vmatprep.mubr.f32.mxu0 0.0
        %1539 = vmatmul.mubr.f32.gmra.mxu0 %v892
        %v1540 = vpop.f32.mrf.mxu0
        %v1541 = vadd.f32 0.0, %v1540
        %v1542 = vpop.f32.mrf.mxu0
        %1543 = vdwg.mxu0
        %v1544 = vmax.f32 %v1389, %v1470
        %v1545 = vmax.f32 %v1390, %v1472
        %v1546 = vmax.f32 %v1391, %v1541
        %v1547 = vld [vmem:[%s6] sm:$0xff]
        %1549 = vset.pattern.permute.xlu0 0
        %1550 = vperm.xlu0 %1549, %v1547
        %v1551 = vpop.permute.xlu0 %1550
        %v1553 = vadd.f32 %v1544, %v1551
        %v1554 = vadd.f32 %v1545, %v1551
        %v1555 = vadd.f32 %v1546, %v1551
        %v1556 = vadd.f32 %v1553, %v728
        %v1557 = vadd.f32 %v1554, %v730
        %v1558 = vadd.f32 %v1555, %v799
        %v1559 = vld [vmem:[%s8] sm:$0xff]
        %1561 = vset.pattern.permute.xlu0 0
        %1562 = vperm.xlu0 %1561, %v1559
        %v1563 = vpop.permute.xlu0 %1562
        %v1565 = vadd.f32 %v1556, %v1563
        %v1566 = vadd.f32 %v1557, %v1563
        %v1567 = vadd.f32 %v1558, %v1563
        %v1568 = vmax.f32 %v1565, 0.0
        %v1569 = vmax.f32 %v1566, 0.0
        %v1570 = vmax.f32 %v1567, 0.0
        %v1571 = vld [vmem:[%s9] sm:$0xff]
        %1573 = vset.pattern.permute.xlu0 0
        %1574 = vperm.xlu0 %1573, %v1571
        %v1575 = vpop.permute.xlu0 %1574
        %v1577 = vmul.f32 %v1568, %v1575
        %v1578 = vmul.f32 %v1569, %v1575
        %v1579 = vmul.f32 %v1570, %v1575
        %v1580 = vrot.slane %v1577, 4
        %v1581 = vadd.f32 %v1577, %v1580
        %v1582 = vrot.slane %v1581, 2
        %v1583 = vadd.f32 %v1581, %v1582
        %v1584 = vrot.slane %v1583, 1
        %v1585 = vadd.f32 %v1583, %v1584
        %v1586 = vrot.slane %v1578, 4
        %v1587 = vadd.f32 %v1578, %v1586
        %v1588 = vrot.slane %v1587, 2
        %v1589 = vadd.f32 %v1587, %v1588
        %v1590 = vrot.slane %v1589, 1
        %v1591 = vadd.f32 %v1589, %v1590
        %vm1592 = vcmask 261120
        %v1593 = vsel %vm1592, %v1579, 0.0
        %v1594 = vrot.slane %v1593, 4
        %v1595 = vadd.f32 %v1593, %v1594
        %v1596 = vrot.slane %v1595, 2
        %v1597 = vadd.f32 %v1595, %v1596
        %v1598 = vrot.slane %v1597, 1
        %v1599 = vadd.f32 %v1597, %v1598
        %v1600 = vld [vmem:[#allocation2] sm:$0x1]
        %1602 = vset.pattern.permute.xlu0 0
        %1603 = vperm.xlu0 %1602, %v1600
        %v1604 = vpop.permute.xlu0 %1603
        %v1606 = vlaneseq
        %v1607 = vshrl.u32 %v1606, 7
        %v1608 = vsub.s32 0, %v1607
        %v1609 = vrot.slane %v1604, %v1608
        %v1610 = vadd.f32 %v1585, %v1609
        %v1611 = vadd.f32 %v1591, %v1609
        %v1612 = vadd.f32 %v1599, %v1609
        %1616 = vrot.lane.b32.xlu0 %v1610, 19
        %v1617 = vpop.permute.xlu0 %1616
        %1618 = vrot.lane.b32.xlu0 %v1611, 19
        %v1619 = vpop.permute.xlu0 %1618
        %1620 = vrot.lane.b32.xlu0 %v1612, 19
        %v1621 = vpop.permute.xlu0 %1620
        %vm1622 = vcmask 154624
        %v1623 = vsel %vm1622, %v1617, %v1619
        %v1624 = vsel %vm1622, %v1619, %v1621
        %v1628 = vmul.f32 %v551, %v1617
        %v1629 = vmul.f32 %v552, %v1623
        %v1630 = vmul.f32 %v553, %v1624
        %1634 = vrot.lane.b32.xlu0 %v1628, 109
        %v1635 = vpop.permute.xlu0 %1634
        %1636 = vrot.lane.b32.xlu0 %v1629, 109
        %v1637 = vpop.permute.xlu0 %1636
        %1638 = vrot.lane.b32.xlu0 %v1630, 109
        %v1639 = vpop.permute.xlu0 %1638
        %v1640 = vsel %vm602, %v1635, %v1637
        %v1641 = vsel %vm602, %v1637, %v1639
        %1645 = vst [vmem:[%s550] sm:$0xff] %v1640
        %1646 = vst [vmem:[%s550 + $0x8] sm:$0xff] %v1641
        %1647 = vst.msk [vmem:[%s550 + $0x10] sm:$0xff] %vm1592, %v1639
        %s1648 = sand.u32 %s300, 1
        %s1649 = scalar_lea.sflag [#allocation5], %s1648
        %s1650 = sand.u32 %s300, 1
        %s1651 = smul.addr %s1650, 24
        %s1652 = scalar_lea.vmem [#allocation12], %s1651
        // Predicated region
        $region85: #{tpu_custom_call.1} parent=63 // pred_check
          %p1653 = pneg %p310
        $region86: #{tpu_custom_call.1} parent=63 // pred_check_branch
          %1655 = sbr.rel (%p1653) target = $region88
        $region87: #{tpu_custom_call.1} parent=63 // pred_region
          %s1657 = ssub.s32 384, 384
          %1658 = vsyncadd %s1649, %s1657
          %s1659 = smul.addr %s36, 3
          %s1660 = smul.addr %s1659, 128
          %s1661 = scalar_lea.hbm %s11, %s1660
          %s1663 = sshll.u32 %s1652, 4
          %s1664 = int_to_ptr.vmem [resolvable:$true] %s1663
          %1666 = dma.vmem_to_hbm [thread:$0]  %s1664, 384, %s1661, %s1649
        $region88: #{tpu_custom_call.1} parent=63 // pred_fallthru
          _
      $region64: #{tpu_custom_call.1} parent=5 // pred_fallthru
        _
      %p1667 = scmp.le.s32.totalorder 2, %s31
      // Predicated region
      $region89: #{tpu_custom_call.1} parent=5 // pred_check
        %p1668 = pneg %p1667
      $region90: #{tpu_custom_call.1} parent=5 // pred_check_branch
        %1670 = sbr.rel (%p1668) target = $region92
      $region91: #{tpu_custom_call.1} parent=5 // pred_region
        %s1671 = ssub.s32 %s31, 2
        // Predicated region
        $region93: #{tpu_custom_call.1} parent=91 // pred_check
          %p1672 = pneg %p316
        $region94: #{tpu_custom_call.1} parent=91 // pred_check_branch
          %1674 = sbr.rel (%p1672) target = $region96
        $region95: #{tpu_custom_call.1} parent=91 // pred_region
          %s1675 = sand.u32 %s301, 1
          %s1676 = scalar_lea.sflag [#allocation5], %s1675
          %s1677 = sand.u32 %s301, 1
          %s1678 = smul.addr %s1677, 24
          %s1679 = scalar_lea.vmem [#allocation12], %s1678
          %1680 = dma.done %s1676, 384
        $region96: #{tpu_custom_call.1} parent=91 // pred_fallthru
          _
      $region92: #{tpu_custom_call.1} parent=5 // pred_fallthru
        _
    $region6: #{tpu_custom_call.1} parent=1 // loop_footer
      %s35 = sadd.s32 1, %s31
    $region7: #{tpu_custom_call.1} parent=1 // loop_footer_branch
      %30 = sbr.rel target = $region3
    $region8: #{tpu_custom_call.1} parent=1 // loop_exit
      _
    %1681 = vsyncpa [#allocation4], 1
    %s1682 = scalar_lea.sflag [#allocation4], 1
    %1683 = vsyncpa %s1682, 1
    %1684 = vsyncpa [#allocation7], 1
    %s1685 = scalar_lea.sflag [#allocation7], 1
    %1686 = vsyncpa %s1685, 1
    %1687 = vsyncpa [#allocation10], 1
    %s1688 = scalar_lea.sflag [#allocation10], 1
    %1689 = vsyncpa %s1688, 1
    %1690 = vsyncpa [#allocation5], 1
    %s1691 = scalar_lea.sflag [#allocation5], 1
    %1692 = vsyncpa %s1691, 1

</llo_original>
